<compile_context>
chip_gen: v7x
topology: tpu7x:2x2x1
jax: 0.10.0
libtpu: 0.0.40
codegen_flags: <defaults>
</compile_context>

<pallas_src>
import jax
import jax.numpy as jnp
from jax.experimental import pallas as pl
from jax.experimental.pallas import tpu as pltpu

NUM_FEATURES = 10
HIDDEN = 30
NUM_CLASSES = 3
LANE = 128   # pad every feature axis to the vreg lane width

# weight-slab plane indices
W_REL1, W_ROOT1, W_REL2, W_ROOT2, W_LIN1, W_LIN2 = range(6)
# bias-slab row indices
B_REL1, B_REL2, B_LIN1, B_LIN2 = range(4)


# ----------------------------------------------------------------------------
# Pallas kernel: whole forward pass (everything fits easily in VMEM).
# ----------------------------------------------------------------------------
def _gnn_kernel(a_ref, x_ref, pool_ref, w_ref, b_ref, out_ref):
    f32 = jnp.float32
    A = a_ref[...]                    # (N_pad, N_pad) weighted adjacency, A[i,j]=w(j->i)
    x = x_ref[...]                    # (N_pad, 128)   node features, lanes >= 10 are 0

    def graph_conv(h, k_rel, k_root, k_bias):
        # out = (A @ h) @ W_rel + h @ W_root + b_rel   (all MXU, f32 accumulate)
        agg = jnp.dot(A, h, preferred_element_type=f32)
        out = (jnp.dot(agg, w_ref[k_rel], preferred_element_type=f32)
               + jnp.dot(h, w_ref[k_root], preferred_element_type=f32)
               + b_ref[k_bias:k_bias + 1, :])
        return jnp.maximum(out, 0.0)

    h = graph_conv(x, W_REL1, W_ROOT1, B_REL1)     # conv1 + relu
    h = graph_conv(h, W_REL2, W_ROOT2, B_REL2)     # conv2 + relu
    # Padded nodes may hold relu(b_rel) garbage, but their adjacency rows/cols and
    # pooling weights are zero, so they never leak into real nodes or the readout.

    # global mean pool as an MXU matmul: (1, N_pad) @ (N_pad, 128) -> (1, 128)
    g = jnp.dot(pool_ref[...], h, preferred_element_type=f32)

    # final MLP: 30 -> 30 -> num_classes (all padded to 128 lanes)
    y = jnp.maximum(jnp.dot(g, w_ref[W_LIN1], preferred_element_type=f32)
                    + b_ref[B_LIN1:B_LIN1 + 1, :], 0.0)
    y = (jnp.dot(y, w_ref[W_LIN2], preferred_element_type=f32)
         + b_ref[B_LIN2:B_LIN2 + 1, :])
    out_ref[...] = y                  # lane-dense (1, 128); logits live in lanes 0:3


# ----------------------------------------------------------------------------
# Plain-JAX glue
# ----------------------------------------------------------------------------
def _pack_params(params):
    """Pack all weights/biases into two lane-dense slabs (2 DMAs total)."""
    def pad_mat(w):
        m = jnp.zeros((LANE, LANE), jnp.float32)
        return m.at[:w.shape[0], :w.shape[1]].set(w)

    def pad_vec(b):
        v = jnp.zeros((LANE,), jnp.float32)
        return v.at[:b.shape[0]].set(b)

    wslab = jnp.stack([pad_mat(params["w_rel1"]), pad_mat(params["w_root1"]),
                       pad_mat(params["w_rel2"]), pad_mat(params["w_root2"]),
                       pad_mat(params["wl1"]), pad_mat(params["wl2"])])     # (6,128,128)
    bslab = jnp.zeros((8, LANE), jnp.float32)
    bslab = bslab.at[B_REL1].set(pad_vec(params["b_rel1"]))
    bslab = bslab.at[B_REL2].set(pad_vec(params["b_rel2"]))
    bslab = bslab.at[B_LIN1].set(pad_vec(params["bl1"]))
    bslab = bslab.at[B_LIN2].set(pad_vec(params["bl2"]))                    # (8,128)
    return wslab, bslab


def survey_forward(x, edge_index, params, edge_weights=None):
    n = x.shape[0]
    n_pad = max(LANE, ((n + LANE - 1) // LANE) * LANE)   # lane-dense node padding
    if edge_weights is None:
        edge_weights = jnp.ones((edge_index.shape[1],), jnp.float32)

    # Dense weighted adjacency: A[dst, src] += w  (GraphConv 'add' aggregation).
    # TODO(synk): for very large N the dense N_pad^2 adjacency should be tiled
    # via a BlockSpec reduction axis instead of living whole in VMEM.
    A = jnp.zeros((n_pad, n_pad), jnp.float32).at[edge_index[1], edge_index[0]].add(edge_weights)
    x_pad = jnp.zeros((n_pad, LANE), jnp.float32).at[:n, :NUM_FEATURES].set(x)
    # Pooling row = mask / n  -> mean over real nodes, zeros out padded nodes.
    pool = ((jnp.arange(n_pad) < n).astype(jnp.float32) / float(n))[None, :]

    wslab, bslab = _pack_params(params)
    inputs = (A, x_pad, pool, wslab, bslab)

    out = pl.pallas_call(
        _gnn_kernel,
        out_shape=jax.ShapeDtypeStruct((1, LANE), jnp.float32),
        in_specs=[pl.BlockSpec(memory_space=pltpu.MemorySpace.VMEM)
                  for _ in inputs],
        out_specs=pl.BlockSpec(memory_space=pltpu.MemorySpace.VMEM),
    )(*inputs)
    return out[:, :NUM_CLASSES]


def init_params(key):
    ks = jax.random.split(key, 10)

    def unif(k, shape, lim):
        return jax.random.uniform(k, shape, jnp.float32, -lim, lim)

    def lin(kw, kb, fan_in, fan_out, bias=True):
        lim = 1.0 / (fan_in ** 0.5)
        w = unif(kw, (fan_in, fan_out), lim)
        b = unif(kb, (fan_out,), lim) if bias else None
        return w, b

    p = {}
    p["w_rel1"], p["b_rel1"] = lin(ks[0], ks[1], NUM_FEATURES, HIDDEN)
    p["w_root1"], _ = lin(ks[2], ks[2], NUM_FEATURES, HIDDEN, bias=False)
    p["w_rel2"], p["b_rel2"] = lin(ks[3], ks[4], HIDDEN, HIDDEN)
    p["w_root2"], _ = lin(ks[5], ks[5], HIDDEN, HIDDEN, bias=False)
    p["wl1"], p["bl1"] = lin(ks[6], ks[7], HIDDEN, HIDDEN)
    p["wl2"], p["bl2"] = lin(ks[8], ks[9], HIDDEN, NUM_CLASSES)
    return p


# ----------------------------------------------------------------------------
# Pure-JAX reference (same math, no Pallas) for a sanity check.
# ----------------------------------------------------------------------------
def survey_forward_ref(x, edge_index, params, edge_weights=None):
    n = x.shape[0]
    if edge_weights is None:
        edge_weights = jnp.ones((edge_index.shape[1],), jnp.float32)
    A = jnp.zeros((n, n), jnp.float32).at[edge_index[1], edge_index[0]].add(edge_weights)

    def graph_conv(h, wr, wroot, br):
        return jnp.maximum((A @ h) @ wr + h @ wroot + br, 0.0)

    h = graph_conv(x, params["w_rel1"], params["w_root1"], params["b_rel1"])
    h = graph_conv(h, params["w_rel2"], params["w_root2"], params["b_rel2"])
    g = jnp.mean(h, axis=0, keepdims=True)
    y = jnp.maximum(g @ params["wl1"] + params["bl1"], 0.0)
    return y @ params["wl2"] + params["bl2"]


if __name__ == "__main__":
    key = jax.random.PRNGKey(0)
    k_feat, k_param = jax.random.split(key)

    # Small "stars" graph: two star motifs (centers 0 and 6, five leaves each)
    # joined by a bridge edge, stored undirected (both directions).
    num_nodes = 12
    src = [0, 0, 0, 0, 0, 6, 6, 6, 6, 6, 0]
    dst = [1, 2, 3, 4, 5, 7, 8, 9, 10, 11, 6]
    ei = jnp.array([src + dst, dst + src], dtype=jnp.int32)   # (2, 22)
    x = jax.random.normal(k_feat, (num_nodes, NUM_FEATURES), jnp.float32)

    params = init_params(k_param)

    out = survey_forward(x, ei, params)
    out = jax.block_until_ready(out)

    ref = survey_forward_ref(x, ei, params)
    assert out.shape == (1, NUM_CLASSES)
    assert bool(jnp.all(jnp.isfinite(out)))
    assert bool(jnp.allclose(out, ref, rtol=1e-4, atol=1e-4)), (out, ref)

    print("KERNEL_OK")
</pallas_src>

<mosaic_0001>
module attributes {stable_mosaic.version = 11 : i64} {
  func.func @_gnn_kernel(%arg0: memref<128x128xf32, #tpu.memory_space<vmem>>, %arg1: memref<128x128xf32, #tpu.memory_space<vmem>>, %arg2: memref<1x128xf32, #tpu.memory_space<vmem>>, %arg3: memref<6x128x128xf32, #tpu.memory_space<vmem>>, %arg4: memref<8x128xf32, #tpu.memory_space<vmem>>, %arg5: memref<1x128xf32, #tpu.memory_space<vmem>>) attributes {dimension_semantics = [], scalar_prefetch = 0 : i64, scratch_operands = 0 : i64, tpu.core_type = #tpu.core_type<tc>} {
    %c0 = arith.constant 0 : index
    %c0_0 = arith.constant 0 : index
    %0 = vector.load %arg0[%c0, %c0_0] : memref<128x128xf32, #tpu.memory_space<vmem>>, vector<128x128xf32>
    %c0_1 = arith.constant 0 : index
    %c0_2 = arith.constant 0 : index
    %1 = vector.load %arg1[%c0_1, %c0_2] : memref<128x128xf32, #tpu.memory_space<vmem>>, vector<128x128xf32>
    %cst = arith.constant dense<0.000000e+00> : vector<128x128xf32>
    %2 = tpu.matmul %0, %1, %cst {dimension_numbers = #tpu.dot_dimension_numbers<[1], [0], [0], [1], [0, 0, 1, 1], [], []>} : vector<128x128xf32>, vector<128x128xf32>, vector<128x128xf32> -> vector<128x128xf32>
    %c0_3 = arith.constant 0 : index
    %c0_4 = arith.constant 0 : index
    %c0_5 = arith.constant 0 : index
    %3 = vector.load %arg3[%c0_3, %c0_4, %c0_5] : memref<6x128x128xf32, #tpu.memory_space<vmem>>, vector<1x128x128xf32>
    %4 = vector.shape_cast %3 : vector<1x128x128xf32> to vector<128x128xf32>
    %cst_6 = arith.constant dense<0.000000e+00> : vector<128x128xf32>
    %5 = tpu.matmul %2, %4, %cst_6 {dimension_numbers = #tpu.dot_dimension_numbers<[1], [0], [0], [1], [0, 0, 1, 1], [], []>} : vector<128x128xf32>, vector<128x128xf32>, vector<128x128xf32> -> vector<128x128xf32>
    %c1 = arith.constant 1 : index
    %c0_7 = arith.constant 0 : index
    %c0_8 = arith.constant 0 : index
    %6 = vector.load %arg3[%c1, %c0_7, %c0_8] : memref<6x128x128xf32, #tpu.memory_space<vmem>>, vector<1x128x128xf32>
    %7 = vector.shape_cast %6 : vector<1x128x128xf32> to vector<128x128xf32>
    %cst_9 = arith.constant dense<0.000000e+00> : vector<128x128xf32>
    %8 = tpu.matmul %1, %7, %cst_9 {dimension_numbers = #tpu.dot_dimension_numbers<[1], [0], [0], [1], [0, 0, 1, 1], [], []>} : vector<128x128xf32>, vector<128x128xf32>, vector<128x128xf32> -> vector<128x128xf32>
    %9 = arith.addf %5, %8 : vector<128x128xf32>
    %c0_10 = arith.constant 0 : index
    %c0_11 = arith.constant 0 : index
    %10 = vector.load %arg4[%c0_10, %c0_11] : memref<8x128xf32, #tpu.memory_space<vmem>>, vector<1x128xf32>
    %11 = vector.broadcast %10 : vector<1x128xf32> to vector<128x128xf32>
    %12 = arith.addf %9, %11 : vector<128x128xf32>
    %cst_12 = arith.constant 0.000000e+00 : f32
    %13 = vector.broadcast %cst_12 : f32 to vector<128x128xf32>
    %14 = arith.maximumf %12, %13 : vector<128x128xf32>
    %cst_13 = arith.constant dense<0.000000e+00> : vector<128x128xf32>
    %15 = tpu.matmul %0, %14, %cst_13 {dimension_numbers = #tpu.dot_dimension_numbers<[1], [0], [0], [1], [0, 0, 1, 1], [], []>} : vector<128x128xf32>, vector<128x128xf32>, vector<128x128xf32> -> vector<128x128xf32>
    %c2 = arith.constant 2 : index
    %c0_14 = arith.constant 0 : index
    %c0_15 = arith.constant 0 : index
    %16 = vector.load %arg3[%c2, %c0_14, %c0_15] : memref<6x128x128xf32, #tpu.memory_space<vmem>>, vector<1x128x128xf32>
    %17 = vector.shape_cast %16 : vector<1x128x128xf32> to vector<128x128xf32>
    %cst_16 = arith.constant dense<0.000000e+00> : vector<128x128xf32>
    %18 = tpu.matmul %15, %17, %cst_16 {dimension_numbers = #tpu.dot_dimension_numbers<[1], [0], [0], [1], [0, 0, 1, 1], [], []>} : vector<128x128xf32>, vector<128x128xf32>, vector<128x128xf32> -> vector<128x128xf32>
    %c3 = arith.constant 3 : index
    %c0_17 = arith.constant 0 : index
    %c0_18 = arith.constant 0 : index
    %19 = vector.load %arg3[%c3, %c0_17, %c0_18] : memref<6x128x128xf32, #tpu.memory_space<vmem>>, vector<1x128x128xf32>
    %20 = vector.shape_cast %19 : vector<1x128x128xf32> to vector<128x128xf32>
    %cst_19 = arith.constant dense<0.000000e+00> : vector<128x128xf32>
    %21 = tpu.matmul %14, %20, %cst_19 {dimension_numbers = #tpu.dot_dimension_numbers<[1], [0], [0], [1], [0, 0, 1, 1], [], []>} : vector<128x128xf32>, vector<128x128xf32>, vector<128x128xf32> -> vector<128x128xf32>
    %22 = arith.addf %18, %21 : vector<128x128xf32>
    %c1_20 = arith.constant 1 : index
    %c0_21 = arith.constant 0 : index
    %23 = vector.load %arg4[%c1_20, %c0_21] : memref<8x128xf32, #tpu.memory_space<vmem>>, vector<1x128xf32>
    %24 = vector.broadcast %23 : vector<1x128xf32> to vector<128x128xf32>
    %25 = arith.addf %22, %24 : vector<128x128xf32>
    %cst_22 = arith.constant 0.000000e+00 : f32
    %26 = vector.broadcast %cst_22 : f32 to vector<128x128xf32>
    %27 = arith.maximumf %25, %26 : vector<128x128xf32>
    %c0_23 = arith.constant 0 : index
    %c0_24 = arith.constant 0 : index
    %28 = vector.load %arg2[%c0_23, %c0_24] : memref<1x128xf32, #tpu.memory_space<vmem>>, vector<1x128xf32>
    %cst_25 = arith.constant dense<0.000000e+00> : vector<1x128xf32>
    %29 = tpu.matmul %28, %27, %cst_25 {dimension_numbers = #tpu.dot_dimension_numbers<[1], [0], [0], [1], [0, 0, 1, 1], [], []>} : vector<1x128xf32>, vector<128x128xf32>, vector<1x128xf32> -> vector<1x128xf32>
    %c4 = arith.constant 4 : index
    %c0_26 = arith.constant 0 : index
    %c0_27 = arith.constant 0 : index
    %30 = vector.load %arg3[%c4, %c0_26, %c0_27] : memref<6x128x128xf32, #tpu.memory_space<vmem>>, vector<1x128x128xf32>
    %31 = vector.shape_cast %30 : vector<1x128x128xf32> to vector<128x128xf32>
    %cst_28 = arith.constant dense<0.000000e+00> : vector<1x128xf32>
    %32 = tpu.matmul %29, %31, %cst_28 {dimension_numbers = #tpu.dot_dimension_numbers<[1], [0], [0], [1], [0, 0, 1, 1], [], []>} : vector<1x128xf32>, vector<128x128xf32>, vector<1x128xf32> -> vector<1x128xf32>
    %c2_29 = arith.constant 2 : index
    %c0_30 = arith.constant 0 : index
    %33 = vector.load %arg4[%c2_29, %c0_30] : memref<8x128xf32, #tpu.memory_space<vmem>>, vector<1x128xf32>
    %34 = arith.addf %32, %33 : vector<1x128xf32>
    %cst_31 = arith.constant 0.000000e+00 : f32
    %35 = vector.broadcast %cst_31 : f32 to vector<1x128xf32>
    %36 = arith.maximumf %34, %35 : vector<1x128xf32>
    %c5 = arith.constant 5 : index
    %c0_32 = arith.constant 0 : index
    %c0_33 = arith.constant 0 : index
    %37 = vector.load %arg3[%c5, %c0_32, %c0_33] : memref<6x128x128xf32, #tpu.memory_space<vmem>>, vector<1x128x128xf32>
    %38 = vector.shape_cast %37 : vector<1x128x128xf32> to vector<128x128xf32>
    %cst_34 = arith.constant dense<0.000000e+00> : vector<1x128xf32>
    %39 = tpu.matmul %36, %38, %cst_34 {dimension_numbers = #tpu.dot_dimension_numbers<[1], [0], [0], [1], [0, 0, 1, 1], [], []>} : vector<1x128xf32>, vector<128x128xf32>, vector<1x128xf32> -> vector<1x128xf32>
    %c3_35 = arith.constant 3 : index
    %c0_36 = arith.constant 0 : index
    %40 = vector.load %arg4[%c3_35, %c0_36] : memref<8x128xf32, #tpu.memory_space<vmem>>, vector<1x128xf32>
    %41 = arith.addf %39, %40 : vector<1x128xf32>
    %c0_37 = arith.constant 0 : index
    %c0_38 = arith.constant 0 : index
    %42 = vector.load %arg5[%c0_37, %c0_38] : memref<1x128xf32, #tpu.memory_space<vmem>>, vector<1x128xf32>
    tpu.vector_store %arg5[%c0_37, %c0_38], %41 {strides = array<i32>} : memref<1x128xf32, #tpu.memory_space<vmem>>, vector<1x128xf32>,
    return
  }
}

</mosaic_0001>

<llo_original>
// kernel: tpu_custom_call.1
$region0: #{tpu_custom_call.1}
  #allocation0 [shape = 'u32[]', space=smem, size = 0x4, offset = 0x4, fixed_abs, tag = 'smem constant byte address 0x4 - core index']
  #allocation1 [shape = 'u32[144,128]{1,0:T(1,128)}', space=vmem, size = 0x12000, scoped, tag = 'internal scratch']
  %s0 = inlined_call_operand.hbm [shape: f32[128,128], index: 0, kind: input, shape index: {}]
  %s1 = inlined_call_operand.hbm [shape: f32[128,128], index: 1, kind: input, shape index: {}]
  %s2 = inlined_call_operand.vmem [shape: f32[1,128], index: 2, kind: input, shape index: {}]
  %s3 = inlined_call_operand.hbm [shape: f32[6,128,128], index: 3, kind: input, shape index: {}]
  %s4 = inlined_call_operand.vmem [shape: f32[8,128], index: 4, kind: input, shape index: {}]
  %s5 = inlined_call_operand.hbm [shape: f32[1,128], index: 5, kind: output, shape index: {}]
  %s6 = sld [smem:[#allocation0]]
  $region42: #{tpu_custom_call.1} parent=0
    _
  %s8 = ssub.s32 1, %s6
  %s9 = scalar_select 0, %s8, %s6
  $region1: #{tpu_custom_call.1} parent=0
    #allocation2 [shape = 'u8[65536]{0}', space=vmem, size = 0x10000, scoped, tag = 'input window, operand 0, single buffered']
    #allocation3 [shape = 's32[1]{0}', space=sflag, size = 0x4, scoped, tag = 'scoped memory for tpu_custom_call.1']
    #allocation4 [shape = 's32[1]{0}', space=sflag, size = 0x4, scoped, tag = 'scoped memory for tpu_custom_call.1']
    #allocation5 [shape = 'u8[65536]{0}', space=vmem, size = 0x10000, scoped, tag = 'input window, operand 1, single buffered']
    #allocation6 [shape = 's32[1]{0}', space=sflag, size = 0x4, scoped, tag = 'scoped memory for tpu_custom_call.1']
    #allocation7 [shape = 'u8[393216]{0}', space=vmem, size = 0x60000, scoped, tag = 'input window, operand 3, single buffered']
    #allocation8 [shape = 'u8[512]{0}', space=vmem, size = 0x400, scoped, tag = 'output window, operand 0, single buffered']
    %10 = vsyncpa [#allocation3], 0
    %11 = vsyncpa [#allocation6], 0
    %12 = vsyncpa [#allocation4], 0
    // Predicated region
    $region2: #{tpu_custom_call.1} parent=1 // pred_check
      _
    $region3: #{tpu_custom_call.1} parent=1 // pred_check_branch
      %14 = sbr.rel (0) target = $region5
    $region4: #{tpu_custom_call.1} parent=1 // pred_region
      %s16 = ssub.s32 2048, 2048
      %17 = vsyncadd [#allocation3], %s16
      %s18 = sshll.u32 [#allocation2], 4
      %s19 = int_to_ptr.vmem [resolvable:$true] %s18
      %24 = dma.hbm_to_vmem [thread:$0]  %s0, 2048, %s19, [#allocation3], 128, 128, 8
    $region5: #{tpu_custom_call.1} parent=1 // pred_fallthru
      _
    // Predicated region
    $region6: #{tpu_custom_call.1} parent=1 // pred_check
      _
    $region7: #{tpu_custom_call.1} parent=1 // pred_check_branch
      %26 = sbr.rel (0) target = $region9
    $region8: #{tpu_custom_call.1} parent=1 // pred_region
      %s28 = ssub.s32 2048, 2048
      %29 = vsyncadd [#allocation6], %s28
      %s30 = sshll.u32 [#allocation5], 4
      %s31 = int_to_ptr.vmem [resolvable:$true] %s30
      %36 = dma.hbm_to_vmem [thread:$0]  %s1, 2048, %s31, [#allocation6], 128, 128, 8
    $region9: #{tpu_custom_call.1} parent=1 // pred_fallthru
      _
    // Predicated region
    $region10: #{tpu_custom_call.1} parent=1 // pred_check
      _
    $region11: #{tpu_custom_call.1} parent=1 // pred_check_branch
      %38 = sbr.rel (0) target = $region13
    $region12: #{tpu_custom_call.1} parent=1 // pred_region
      _
    $region13: #{tpu_custom_call.1} parent=1 // pred_fallthru
      _
    // Predicated region
    $region14: #{tpu_custom_call.1} parent=1 // pred_check
      _
    $region15: #{tpu_custom_call.1} parent=1 // pred_check_branch
      %40 = sbr.rel (0) target = $region17
    $region16: #{tpu_custom_call.1} parent=1 // pred_region
      %s42 = ssub.s32 12288, 12288
      %43 = vsyncadd [#allocation6], %s42
      %s44 = sshll.u32 [#allocation7], 4
      %s45 = int_to_ptr.vmem [resolvable:$true] %s44
      %50 = dma.hbm_to_vmem [thread:$0]  %s3, 12288, %s45, [#allocation6], 128, 128, 8
    $region17: #{tpu_custom_call.1} parent=1 // pred_fallthru
      _
    // Predicated region
    $region18: #{tpu_custom_call.1} parent=1 // pred_check
      _
    $region19: #{tpu_custom_call.1} parent=1 // pred_check_branch
      %52 = sbr.rel (0) target = $region21
    $region20: #{tpu_custom_call.1} parent=1 // pred_region
      _
    $region21: #{tpu_custom_call.1} parent=1 // pred_fallthru
      _
    // Predicated region
    $region22: #{tpu_custom_call.1} parent=1 // pred_check
      _
    $region23: #{tpu_custom_call.1} parent=1 // pred_check_branch
      %54 = sbr.rel (0) target = $region25
    $region24: #{tpu_custom_call.1} parent=1 // pred_region
      %55 = dma.done [#allocation3], 2048
    $region25: #{tpu_custom_call.1} parent=1 // pred_fallthru
      _
    // Predicated region
    $region26: #{tpu_custom_call.1} parent=1 // pred_check
      _
    $region27: #{tpu_custom_call.1} parent=1 // pred_check_branch
      %57 = sbr.rel (0) target = $region29
    $region28: #{tpu_custom_call.1} parent=1 // pred_region
      %58 = dma.done [#allocation6], 2048
    $region29: #{tpu_custom_call.1} parent=1 // pred_fallthru
      _
    // Predicated region
    $region30: #{tpu_custom_call.1} parent=1 // pred_check
      _
    $region31: #{tpu_custom_call.1} parent=1 // pred_check_branch
      %60 = sbr.rel (0) target = $region33
    $region32: #{tpu_custom_call.1} parent=1 // pred_region
      %61 = dma.done [#allocation6], 12288
    $region33: #{tpu_custom_call.1} parent=1 // pred_fallthru
      _
    %v62 = vld [vmem:[#allocation2] sm:$0xff]
    %v63 = vld [vmem:[#allocation2 + $0x8] sm:$0xff]
    %v64 = vld [vmem:[#allocation2 + $0x10] sm:$0xff]
    %v65 = vld [vmem:[#allocation2 + $0x18] sm:$0xff]
    %v66 = vld [vmem:[#allocation2 + $0x20] sm:$0xff]
    %v67 = vld [vmem:[#allocation2 + $0x28] sm:$0xff]
    %v68 = vld [vmem:[#allocation2 + $0x30] sm:$0xff]
    %v69 = vld [vmem:[#allocation2 + $0x38] sm:$0xff]
    %v70 = vld [vmem:[#allocation2 + $0x40] sm:$0xff]
    %v71 = vld [vmem:[#allocation2 + $0x48] sm:$0xff]
    %v72 = vld [vmem:[#allocation2 + $0x50] sm:$0xff]
    %v73 = vld [vmem:[#allocation2 + $0x58] sm:$0xff]
    %v74 = vld [vmem:[#allocation2 + $0x60] sm:$0xff]
    %v75 = vld [vmem:[#allocation2 + $0x68] sm:$0xff]
    %v76 = vld [vmem:[#allocation2 + $0x70] sm:$0xff]
    %v77 = vld [vmem:[#allocation2 + $0x78] sm:$0xff]
    %v78 = vld [vmem:[#allocation5] sm:$0xff]
    %v79 = vld [vmem:[#allocation5 + $0x8] sm:$0xff]
    %v80 = vld [vmem:[#allocation5 + $0x10] sm:$0xff]
    %v81 = vld [vmem:[#allocation5 + $0x18] sm:$0xff]
    %v82 = vld [vmem:[#allocation5 + $0x20] sm:$0xff]
    %v83 = vld [vmem:[#allocation5 + $0x28] sm:$0xff]
    %v84 = vld [vmem:[#allocation5 + $0x30] sm:$0xff]
    %v85 = vld [vmem:[#allocation5 + $0x38] sm:$0xff]
    %v86 = vld [vmem:[#allocation5 + $0x40] sm:$0xff]
    %v87 = vld [vmem:[#allocation5 + $0x48] sm:$0xff]
    %v88 = vld [vmem:[#allocation5 + $0x50] sm:$0xff]
    %v89 = vld [vmem:[#allocation5 + $0x58] sm:$0xff]
    %v90 = vld [vmem:[#allocation5 + $0x60] sm:$0xff]
    %v91 = vld [vmem:[#allocation5 + $0x68] sm:$0xff]
    %v92 = vld [vmem:[#allocation5 + $0x70] sm:$0xff]
    %v93 = vld [vmem:[#allocation5 + $0x78] sm:$0xff]
    %94 = vmatprep.subr.mxu0 0.0
    %95 = vmatpush1.msra.mxu0 %v78
    %96 = vmatprep.subr.mxu0 0.0
    %97 = vmatpush1.msra.mxu0 %v79
    %98 = vmatprep.subr.mxu0 0.0
    %99 = vmatpush1.msra.mxu0 %v80
    %100 = vmatprep.subr.mxu0 0.0
    %101 = vmatpush1.msra.mxu0 %v81
    %102 = vmatprep.subr.mxu0 0.0
    %103 = vmatpush1.msra.mxu0 %v82
    %104 = vmatprep.subr.mxu0 0.0
    %105 = vmatpush1.msra.mxu0 %v83
    %106 = vmatprep.subr.mxu0 0.0
    %107 = vmatpush1.msra.mxu0 %v84
    %108 = vmatprep.subr.mxu0 0.0
    %109 = vmatpush1.msra.mxu0 %v85
    %110 = vmatprep.subr.mxu0 0.0
    %111 = vmatpush1.msra.mxu0 %v86
    %112 = vmatprep.subr.mxu0 0.0
    %113 = vmatpush1.msra.mxu0 %v87
    %114 = vmatprep.subr.mxu0 0.0
    %115 = vmatpush1.msra.mxu0 %v88
    %116 = vmatprep.subr.mxu0 0.0
    %117 = vmatpush1.msra.mxu0 %v89
    %118 = vmatprep.subr.mxu0 0.0
    %119 = vmatpush1.msra.mxu0 %v90
    %120 = vmatprep.subr.mxu0 0.0
    %121 = vmatpush1.msra.mxu0 %v91
    %122 = vmatprep.subr.mxu0 0.0
    %123 = vmatpush1.msra.mxu0 %v92
    %124 = vmatprep.subr.mxu0 0.0
    %125 = vmatpush1.msra.mxu0 %v93
    %126 = vmatprep.subr.mxu0 0.0
    %127 = vmatpush1.msra.mxu0 0.0
    %128 = vmatprep.subr.mxu0 0.0
    %129 = vmatpush1.msra.mxu0 0.0
    %130 = vmatprep.subr.mxu0 0.0
    %131 = vmatpush1.msra.mxu0 0.0
    %132 = vmatprep.subr.mxu0 0.0
    %133 = vmatpush1.msra.mxu0 0.0
    %134 = vmatprep.subr.mxu0 0.0
    %135 = vmatpush1.msra.mxu0 0.0
    %136 = vmatprep.subr.mxu0 0.0
    %137 = vmatpush1.msra.mxu0 0.0
    %138 = vmatprep.subr.mxu0 0.0
    %139 = vmatpush1.msra.mxu0 0.0
    %140 = vmatprep.subr.mxu0 0.0
    %141 = vmatpush1.msra.mxu0 0.0
    %142 = vmatprep.subr.mxu0 0.0
    %143 = vmatpush1.msra.mxu0 0.0
    %144 = vmatprep.subr.mxu0 0.0
    %145 = vmatpush1.msra.mxu0 0.0
    %146 = vmatprep.subr.mxu0 0.0
    %147 = vmatpush1.msra.mxu0 0.0
    %148 = vmatprep.subr.mxu0 0.0
    %149 = vmatpush1.msra.mxu0 0.0
    %150 = vmatprep.subr.mxu0 0.0
    %151 = vmatpush1.msra.mxu0 0.0
    %152 = vmatprep.subr.mxu0 0.0
    %153 = vmatpush1.msra.mxu0 0.0
    %154 = vmatprep.subr.mxu0 0.0
    %155 = vmatpush1.msra.mxu0 0.0
    %156 = vmatprep.subr.mxu0 0.0
    %157 = vmatpush1.msra.mxu0 0.0
    %158 = vmatprep.mubr.f32.mxu0 0.0
    %159 = vmatmul.mubr.f32.gmra.mrb[0].mxu0 %v62
    %v160 = vpop.f32.mrb[0].mxu0
    %v161 = vadd.f32 0.0, %v160
    %v162 = vpop.f32.mrb[0].mxu0
    %163 = vmatprep.mubr.f32.mxu0 0.0
    %164 = vmatmul.mubr.f32.gmra.mrb[0].mxu0 %v63
    %v165 = vpop.f32.mrb[0].mxu0
    %v166 = vadd.f32 0.0, %v165
    %v167 = vpop.f32.mrb[0].mxu0
    %168 = vmatprep.mubr.f32.mxu0 0.0
    %169 = vmatmul.mubr.f32.gmra.mrb[0].mxu0 %v64
    %v170 = vpop.f32.mrb[0].mxu0
    %v171 = vadd.f32 0.0, %v170
    %v172 = vpop.f32.mrb[0].mxu0
    %173 = vmatprep.mubr.f32.mxu0 0.0
    %174 = vmatmul.mubr.f32.gmra.mrb[0].mxu0 %v65
    %v175 = vpop.f32.mrb[0].mxu0
    %v176 = vadd.f32 0.0, %v175
    %v177 = vpop.f32.mrb[0].mxu0
    %178 = vmatprep.mubr.f32.mxu0 0.0
    %179 = vmatmul.mubr.f32.gmra.mrb[0].mxu0 %v66
    %v180 = vpop.f32.mrb[0].mxu0
    %v181 = vadd.f32 0.0, %v180
    %v182 = vpop.f32.mrb[0].mxu0
    %183 = vmatprep.mubr.f32.mxu0 0.0
    %184 = vmatmul.mubr.f32.gmra.mrb[0].mxu0 %v67
    %v185 = vpop.f32.mrb[0].mxu0
    %v186 = vadd.f32 0.0, %v185
    %v187 = vpop.f32.mrb[0].mxu0
    %188 = vmatprep.mubr.f32.mxu0 0.0
    %189 = vmatmul.mubr.f32.gmra.mrb[0].mxu0 %v68
    %v190 = vpop.f32.mrb[0].mxu0
    %v191 = vadd.f32 0.0, %v190
    %v192 = vpop.f32.mrb[0].mxu0
    %193 = vmatprep.mubr.f32.mxu0 0.0
    %194 = vmatmul.mubr.f32.gmra.mrb[0].mxu0 %v69
    %v195 = vpop.f32.mrb[0].mxu0
    %v196 = vadd.f32 0.0, %v195
    %v197 = vpop.f32.mrb[0].mxu0
    %198 = vmatprep.mubr.f32.mxu0 0.0
    %199 = vmatmul.mubr.f32.gmra.mrb[0].mxu0 %v70
    %v200 = vpop.f32.mrb[0].mxu0
    %v201 = vadd.f32 0.0, %v200
    %v202 = vpop.f32.mrb[0].mxu0
    %203 = vmatprep.mubr.f32.mxu0 0.0
    %204 = vmatmul.mubr.f32.gmra.mrb[0].mxu0 %v71
    %v205 = vpop.f32.mrb[0].mxu0
    %v206 = vadd.f32 0.0, %v205
    %v207 = vpop.f32.mrb[0].mxu0
    %208 = vmatprep.mubr.f32.mxu0 0.0
    %209 = vmatmul.mubr.f32.gmra.mrb[0].mxu0 %v72
    %v210 = vpop.f32.mrb[0].mxu0
    %v211 = vadd.f32 0.0, %v210
    %v212 = vpop.f32.mrb[0].mxu0
    %213 = vmatprep.mubr.f32.mxu0 0.0
    %214 = vmatmul.mubr.f32.gmra.mrb[0].mxu0 %v73
    %v215 = vpop.f32.mrb[0].mxu0
    %v216 = vadd.f32 0.0, %v215
    %v217 = vpop.f32.mrb[0].mxu0
    %218 = vmatprep.mubr.f32.mxu0 0.0
    %219 = vmatmul.mubr.f32.gmra.mrb[0].mxu0 %v74
    %v220 = vpop.f32.mrb[0].mxu0
    %v221 = vadd.f32 0.0, %v220
    %v222 = vpop.f32.mrb[0].mxu0
    %223 = vmatprep.mubr.f32.mxu0 0.0
    %224 = vmatmul.mubr.f32.gmra.mrb[0].mxu0 %v75
    %v225 = vpop.f32.mrb[0].mxu0
    %v226 = vadd.f32 0.0, %v225
    %v227 = vpop.f32.mrb[0].mxu0
    %228 = vmatprep.mubr.f32.mxu0 0.0
    %229 = vmatmul.mubr.f32.gmra.mrb[0].mxu0 %v76
    %v230 = vpop.f32.mrb[0].mxu0
    %v231 = vadd.f32 0.0, %v230
    %v232 = vpop.f32.mrb[0].mxu0
    %233 = vmatprep.mubr.f32.mxu0 0.0
    %234 = vmatmul.mubr.f32.gmra.mrb[0].mxu0 %v77
    %v235 = vpop.f32.mrb[0].mxu0
    %v236 = vadd.f32 0.0, %v235
    %v237 = vpop.f32.mrb[0].mxu0
    %238 = vdwg.mxu0
    %v239 = vld [vmem:[#allocation7] sm:$0xff]
    %v240 = vld [vmem:[#allocation7 + $0x8] sm:$0xff]
    %v241 = vld [vmem:[#allocation7 + $0x10] sm:$0xff]
    %v242 = vld [vmem:[#allocation7 + $0x18] sm:$0xff]
    %v243 = vld [vmem:[#allocation7 + $0x20] sm:$0xff]
    %v244 = vld [vmem:[#allocation7 + $0x28] sm:$0xff]
    %v245 = vld [vmem:[#allocation7 + $0x30] sm:$0xff]
    %v246 = vld [vmem:[#allocation7 + $0x38] sm:$0xff]
    %v247 = vld [vmem:[#allocation7 + $0x40] sm:$0xff]
    %v248 = vld [vmem:[#allocation7 + $0x48] sm:$0xff]
    %v249 = vld [vmem:[#allocation7 + $0x50] sm:$0xff]
    %v250 = vld [vmem:[#allocation7 + $0x58] sm:$0xff]
    %v251 = vld [vmem:[#allocation7 + $0x60] sm:$0xff]
    %v252 = vld [vmem:[#allocation7 + $0x68] sm:$0xff]
    %v253 = vld [vmem:[#allocation7 + $0x70] sm:$0xff]
    %v254 = vld [vmem:[#allocation7 + $0x78] sm:$0xff]
    %s255 = scalar_lea.vmem [#allocation7], 128
    %v256 = vld [vmem:[%s255] sm:$0xff]
    %v257 = vld [vmem:[%s255 + $0x8] sm:$0xff]
    %v258 = vld [vmem:[%s255 + $0x10] sm:$0xff]
    %v259 = vld [vmem:[%s255 + $0x18] sm:$0xff]
    %v260 = vld [vmem:[%s255 + $0x20] sm:$0xff]
    %v261 = vld [vmem:[%s255 + $0x28] sm:$0xff]
    %v262 = vld [vmem:[%s255 + $0x30] sm:$0xff]
    %v263 = vld [vmem:[%s255 + $0x38] sm:$0xff]
    %v264 = vld [vmem:[%s255 + $0x40] sm:$0xff]
    %v265 = vld [vmem:[%s255 + $0x48] sm:$0xff]
    %v266 = vld [vmem:[%s255 + $0x50] sm:$0xff]
    %v267 = vld [vmem:[%s255 + $0x58] sm:$0xff]
    %v268 = vld [vmem:[%s255 + $0x60] sm:$0xff]
    %v269 = vld [vmem:[%s255 + $0x68] sm:$0xff]
    %v270 = vld [vmem:[%s255 + $0x70] sm:$0xff]
    %v271 = vld [vmem:[%s255 + $0x78] sm:$0xff]
    %272 = vmatprep.subr.mxu0 0.0
    %273 = vmatpush1.msra.mxu0 %v256
    %274 = vmatprep.subr.mxu0 0.0
    %275 = vmatpush1.msra.mxu0 %v257
    %276 = vmatprep.subr.mxu0 0.0
    %277 = vmatpush1.msra.mxu0 %v258
    %278 = vmatprep.subr.mxu0 0.0
    %279 = vmatpush1.msra.mxu0 %v259
    %280 = vmatprep.subr.mxu0 0.0
    %281 = vmatpush1.msra.mxu0 %v260
    %282 = vmatprep.subr.mxu0 0.0
    %283 = vmatpush1.msra.mxu0 %v261
    %284 = vmatprep.subr.mxu0 0.0
    %285 = vmatpush1.msra.mxu0 %v262
    %286 = vmatprep.subr.mxu0 0.0
    %287 = vmatpush1.msra.mxu0 %v263
    %288 = vmatprep.subr.mxu0 0.0
    %289 = vmatpush1.msra.mxu0 %v264
    %290 = vmatprep.subr.mxu0 0.0
    %291 = vmatpush1.msra.mxu0 %v265
    %292 = vmatprep.subr.mxu0 0.0
    %293 = vmatpush1.msra.mxu0 %v266
    %294 = vmatprep.subr.mxu0 0.0
    %295 = vmatpush1.msra.mxu0 %v267
    %296 = vmatprep.subr.mxu0 0.0
    %297 = vmatpush1.msra.mxu0 %v268
    %298 = vmatprep.subr.mxu0 0.0
    %299 = vmatpush1.msra.mxu0 %v269
    %300 = vmatprep.subr.mxu0 0.0
    %301 = vmatpush1.msra.mxu0 %v270
    %302 = vmatprep.subr.mxu0 0.0
    %303 = vmatpush1.msra.mxu0 %v271
    %304 = vmatprep.subr.mxu0 0.0
    %305 = vmatpush1.msra.mxu0 0.0
    %306 = vmatprep.subr.mxu0 0.0
    %307 = vmatpush1.msra.mxu0 0.0
    %308 = vmatprep.subr.mxu0 0.0
    %309 = vmatpush1.msra.mxu0 0.0
    %310 = vmatprep.subr.mxu0 0.0
    %311 = vmatpush1.msra.mxu0 0.0
    %312 = vmatprep.subr.mxu0 0.0
    %313 = vmatpush1.msra.mxu0 0.0
    %314 = vmatprep.subr.mxu0 0.0
    %315 = vmatpush1.msra.mxu0 0.0
    %316 = vmatprep.subr.mxu0 0.0
    %317 = vmatpush1.msra.mxu0 0.0
    %318 = vmatprep.subr.mxu0 0.0
    %319 = vmatpush1.msra.mxu0 0.0
    %320 = vmatprep.subr.mxu0 0.0
    %321 = vmatpush1.msra.mxu0 0.0
    %322 = vmatprep.subr.mxu0 0.0
    %323 = vmatpush1.msra.mxu0 0.0
    %324 = vmatprep.subr.mxu0 0.0
    %325 = vmatpush1.msra.mxu0 0.0
    %326 = vmatprep.subr.mxu0 0.0
    %327 = vmatpush1.msra.mxu0 0.0
    %328 = vmatprep.subr.mxu0 0.0
    %329 = vmatpush1.msra.mxu0 0.0
    %330 = vmatprep.subr.mxu0 0.0
    %331 = vmatpush1.msra.mxu0 0.0
    %332 = vmatprep.subr.mxu0 0.0
    %333 = vmatpush1.msra.mxu0 0.0
    %334 = vmatprep.subr.mxu0 0.0
    %335 = vmatpush1.msra.mxu0 0.0
    %336 = vmatprep.mubr.f32.mxu0 0.0
    %337 = vmatmul.mubr.f32.gmra.mrb[0].mxu0 %v78
    %v338 = vpop.f32.mrb[0].mxu0
    %v339 = vadd.f32 0.0, %v338
    %v340 = vpop.f32.mrb[0].mxu0
    %341 = vmatprep.mubr.f32.mxu0 0.0
    %342 = vmatmul.mubr.f32.gmra.mrb[0].mxu0 %v79
    %v343 = vpop.f32.mrb[0].mxu0
    %v344 = vadd.f32 0.0, %v343
    %v345 = vpop.f32.mrb[0].mxu0
    %346 = vmatprep.mubr.f32.mxu0 0.0
    %347 = vmatmul.mubr.f32.gmra.mrb[0].mxu0 %v80
    %v348 = vpop.f32.mrb[0].mxu0
    %v349 = vadd.f32 0.0, %v348
    %v350 = vpop.f32.mrb[0].mxu0
    %351 = vmatprep.mubr.f32.mxu0 0.0
    %352 = vmatmul.mubr.f32.gmra.mrb[0].mxu0 %v81
    %v353 = vpop.f32.mrb[0].mxu0
    %v354 = vadd.f32 0.0, %v353
    %v355 = vpop.f32.mrb[0].mxu0
    %356 = vmatprep.mubr.f32.mxu0 0.0
    %357 = vmatmul.mubr.f32.gmra.mrb[0].mxu0 %v82
    %v358 = vpop.f32.mrb[0].mxu0
    %v359 = vadd.f32 0.0, %v358
    %v360 = vpop.f32.mrb[0].mxu0
    %361 = vmatprep.mubr.f32.mxu0 0.0
    %362 = vmatmul.mubr.f32.gmra.mrb[0].mxu0 %v83
    %v363 = vpop.f32.mrb[0].mxu0
    %v364 = vadd.f32 0.0, %v363
    %v365 = vpop.f32.mrb[0].mxu0
    %366 = vmatprep.mubr.f32.mxu0 0.0
    %367 = vmatmul.mubr.f32.gmra.mrb[0].mxu0 %v84
    %v368 = vpop.f32.mrb[0].mxu0
    %v369 = vadd.f32 0.0, %v368
    %v370 = vpop.f32.mrb[0].mxu0
    %371 = vmatprep.mubr.f32.mxu0 0.0
    %372 = vmatmul.mubr.f32.gmra.mrb[0].mxu0 %v85
    %v373 = vpop.f32.mrb[0].mxu0
    %v374 = vadd.f32 0.0, %v373
    %v375 = vpop.f32.mrb[0].mxu0
    %376 = vmatprep.mubr.f32.mxu0 0.0
    %377 = vmatmul.mubr.f32.gmra.mrb[0].mxu0 %v86
    %v378 = vpop.f32.mrb[0].mxu0
    %v379 = vadd.f32 0.0, %v378
    %v380 = vpop.f32.mrb[0].mxu0
    %381 = vmatprep.mubr.f32.mxu0 0.0
    %382 = vmatmul.mubr.f32.gmra.mrb[0].mxu0 %v87
    %v383 = vpop.f32.mrb[0].mxu0
    %v384 = vadd.f32 0.0, %v383
    %v385 = vpop.f32.mrb[0].mxu0
    %386 = vmatprep.mubr.f32.mxu0 0.0
    %387 = vmatmul.mubr.f32.gmra.mrb[0].mxu0 %v88
    %v388 = vpop.f32.mrb[0].mxu0
    %v389 = vadd.f32 0.0, %v388
    %v390 = vpop.f32.mrb[0].mxu0
    %391 = vmatprep.mubr.f32.mxu0 0.0
    %392 = vmatmul.mubr.f32.gmra.mrb[0].mxu0 %v89
    %v393 = vpop.f32.mrb[0].mxu0
    %v394 = vadd.f32 0.0, %v393
    %v395 = vpop.f32.mrb[0].mxu0
    %396 = vmatprep.mubr.f32.mxu0 0.0
    %397 = vmatmul.mubr.f32.gmra.mrb[0].mxu0 %v90
    %v398 = vpop.f32.mrb[0].mxu0
    %v399 = vadd.f32 0.0, %v398
    %v400 = vpop.f32.mrb[0].mxu0
    %401 = vmatprep.mubr.f32.mxu0 0.0
    %402 = vmatmul.mubr.f32.gmra.mrb[0].mxu0 %v91
    %v403 = vpop.f32.mrb[0].mxu0
    %v404 = vadd.f32 0.0, %v403
    %v405 = vpop.f32.mrb[0].mxu0
    %406 = vmatprep.mubr.f32.mxu0 0.0
    %407 = vmatmul.mubr.f32.gmra.mrb[0].mxu0 %v92
    %v408 = vpop.f32.mrb[0].mxu0
    %v409 = vadd.f32 0.0, %v408
    %v410 = vpop.f32.mrb[0].mxu0
    %411 = vmatprep.mubr.f32.mxu0 0.0
    %412 = vmatmul.mubr.f32.gmra.mrb[0].mxu0 %v93
    %v413 = vpop.f32.mrb[0].mxu0
    %v414 = vadd.f32 0.0, %v413
    %v415 = vpop.f32.mrb[0].mxu0
    %416 = vdwg.mxu0
    %417 = vmatprep.subr.mxu0 0.0
    %418 = vmatpush1.msra.mxu0 %v239
    %419 = vmatprep.subr.mxu0 0.0
    %420 = vmatpush1.msra.mxu0 %v240
    %421 = vmatprep.subr.mxu0 0.0
    %422 = vmatpush1.msra.mxu0 %v241
    %423 = vmatprep.subr.mxu0 0.0
    %424 = vmatpush1.msra.mxu0 %v242
    %425 = vmatprep.subr.mxu0 0.0
    %426 = vmatpush1.msra.mxu0 %v243
    %427 = vmatprep.subr.mxu0 0.0
    %428 = vmatpush1.msra.mxu0 %v244
    %429 = vmatprep.subr.mxu0 0.0
    %430 = vmatpush1.msra.mxu0 %v245
    %431 = vmatprep.subr.mxu0 0.0
    %432 = vmatpush1.msra.mxu0 %v246
    %433 = vmatprep.subr.mxu0 0.0
    %434 = vmatpush1.msra.mxu0 %v247
    %435 = vmatprep.subr.mxu0 0.0
    %436 = vmatpush1.msra.mxu0 %v248
    %437 = vmatprep.subr.mxu0 0.0
    %438 = vmatpush1.msra.mxu0 %v249
    %439 = vmatprep.subr.mxu0 0.0
    %440 = vmatpush1.msra.mxu0 %v250
    %441 = vmatprep.subr.mxu0 0.0
    %442 = vmatpush1.msra.mxu0 %v251
    %443 = vmatprep.subr.mxu0 0.0
    %444 = vmatpush1.msra.mxu0 %v252
    %445 = vmatprep.subr.mxu0 0.0
    %446 = vmatpush1.msra.mxu0 %v253
    %447 = vmatprep.subr.mxu0 0.0
    %448 = vmatpush1.msra.mxu0 %v254
    %449 = vmatprep.subr.mxu0 0.0
    %450 = vmatpush1.msra.mxu0 0.0
    %451 = vmatprep.subr.mxu0 0.0
    %452 = vmatpush1.msra.mxu0 0.0
    %453 = vmatprep.subr.mxu0 0.0
    %454 = vmatpush1.msra.mxu0 0.0
    %455 = vmatprep.subr.mxu0 0.0
    %456 = vmatpush1.msra.mxu0 0.0
    %457 = vmatprep.subr.mxu0 0.0
    %458 = vmatpush1.msra.mxu0 0.0
    %459 = vmatprep.subr.mxu0 0.0
    %460 = vmatpush1.msra.mxu0 0.0
    %461 = vmatprep.subr.mxu0 0.0
    %462 = vmatpush1.msra.mxu0 0.0
    %463 = vmatprep.subr.mxu0 0.0
    %464 = vmatpush1.msra.mxu0 0.0
    %465 = vmatprep.subr.mxu0 0.0
    %466 = vmatpush1.msra.mxu0 0.0
    %467 = vmatprep.subr.mxu0 0.0
    %468 = vmatpush1.msra.mxu0 0.0
    %469 = vmatprep.subr.mxu0 0.0
    %470 = vmatpush1.msra.mxu0 0.0
    %471 = vmatprep.subr.mxu0 0.0
    %472 = vmatpush1.msra.mxu0 0.0
    %473 = vmatprep.subr.mxu0 0.0
    %474 = vmatpush1.msra.mxu0 0.0
    %475 = vmatprep.subr.mxu0 0.0
    %476 = vmatpush1.msra.mxu0 0.0
    %477 = vmatprep.subr.mxu0 0.0
    %478 = vmatpush1.msra.mxu0 0.0
    %479 = vmatprep.subr.mxu0 0.0
    %480 = vmatpush1.msra.mxu0 0.0
    %481 = vmatprep.mubr.f32.mxu0 0.0
    %482 = vmatmul.mubr.f32.gmra.mrb[0].mxu0 %v161
    %v483 = vpop.f32.mrb[0].mxu0
    %v484 = vadd.f32 %v339, %v483
    %v485 = vpop.f32.mrb[0].mxu0
    %486 = vmatprep.mubr.f32.mxu0 0.0
    %487 = vmatmul.mubr.f32.gmra.mrb[0].mxu0 %v166
    %v488 = vpop.f32.mrb[0].mxu0
    %v489 = vadd.f32 %v344, %v488
    %v490 = vpop.f32.mrb[0].mxu0
    %491 = vmatprep.mubr.f32.mxu0 0.0
    %492 = vmatmul.mubr.f32.gmra.mrb[0].mxu0 %v171
    %v493 = vpop.f32.mrb[0].mxu0
    %v494 = vadd.f32 %v349, %v493
    %v495 = vpop.f32.mrb[0].mxu0
    %496 = vmatprep.mubr.f32.mxu0 0.0
    %497 = vmatmul.mubr.f32.gmra.mrb[0].mxu0 %v176
    %v498 = vpop.f32.mrb[0].mxu0
    %v499 = vadd.f32 %v354, %v498
    %v500 = vpop.f32.mrb[0].mxu0
    %501 = vmatprep.mubr.f32.mxu0 0.0
    %502 = vmatmul.mubr.f32.gmra.mrb[0].mxu0 %v181
    %v503 = vpop.f32.mrb[0].mxu0
    %v504 = vadd.f32 %v359, %v503
    %v505 = vpop.f32.mrb[0].mxu0
    %506 = vmatprep.mubr.f32.mxu0 0.0
    %507 = vmatmul.mubr.f32.gmra.mrb[0].mxu0 %v186
    %v508 = vpop.f32.mrb[0].mxu0
    %v509 = vadd.f32 %v364, %v508
    %v510 = vpop.f32.mrb[0].mxu0
    %511 = vmatprep.mubr.f32.mxu0 0.0
    %512 = vmatmul.mubr.f32.gmra.mrb[0].mxu0 %v191
    %v513 = vpop.f32.mrb[0].mxu0
    %v514 = vadd.f32 %v369, %v513
    %v515 = vpop.f32.mrb[0].mxu0
    %516 = vmatprep.mubr.f32.mxu0 0.0
    %517 = vmatmul.mubr.f32.gmra.mrb[0].mxu0 %v196
    %v518 = vpop.f32.mrb[0].mxu0
    %v519 = vadd.f32 %v374, %v518
    %v520 = vpop.f32.mrb[0].mxu0
    %521 = vmatprep.mubr.f32.mxu0 0.0
    %522 = vmatmul.mubr.f32.gmra.mrb[0].mxu0 %v201
    %v523 = vpop.f32.mrb[0].mxu0
    %v524 = vadd.f32 %v379, %v523
    %v525 = vpop.f32.mrb[0].mxu0
    %526 = vmatprep.mubr.f32.mxu0 0.0
    %527 = vmatmul.mubr.f32.gmra.mrb[0].mxu0 %v206
    %v528 = vpop.f32.mrb[0].mxu0
    %v529 = vadd.f32 %v384, %v528
    %v530 = vpop.f32.mrb[0].mxu0
    %531 = vmatprep.mubr.f32.mxu0 0.0
    %532 = vmatmul.mubr.f32.gmra.mrb[0].mxu0 %v211
    %v533 = vpop.f32.mrb[0].mxu0
    %v534 = vadd.f32 %v389, %v533
    %v535 = vpop.f32.mrb[0].mxu0
    %536 = vmatprep.mubr.f32.mxu0 0.0
    %537 = vmatmul.mubr.f32.gmra.mrb[0].mxu0 %v216
    %v538 = vpop.f32.mrb[0].mxu0
    %v539 = vadd.f32 %v394, %v538
    %v540 = vpop.f32.mrb[0].mxu0
    %541 = vmatprep.mubr.f32.mxu0 0.0
    %542 = vmatmul.mubr.f32.gmra.mrb[0].mxu0 %v221
    %v543 = vpop.f32.mrb[0].mxu0
    %v544 = vadd.f32 %v399, %v543
    %v545 = vpop.f32.mrb[0].mxu0
    %546 = vmatprep.mubr.f32.mxu0 0.0
    %547 = vmatmul.mubr.f32.gmra.mrb[0].mxu0 %v226
    %v548 = vpop.f32.mrb[0].mxu0
    %v549 = vadd.f32 %v404, %v548
    %v550 = vpop.f32.mrb[0].mxu0
    %551 = vmatprep.mubr.f32.mxu0 0.0
    %552 = vmatmul.mubr.f32.gmra.mrb[0].mxu0 %v231
    %v553 = vpop.f32.mrb[0].mxu0
    %v554 = vadd.f32 %v409, %v553
    %v555 = vpop.f32.mrb[0].mxu0
    %556 = vmatprep.mubr.f32.mxu0 0.0
    %557 = vmatmul.mubr.f32.gmra.mrb[0].mxu0 %v236
    %v558 = vpop.f32.mrb[0].mxu0
    %v559 = vadd.f32 %v414, %v558
    %v560 = vpop.f32.mrb[0].mxu0
    %561 = vdwg.mxu0
    %v562 = vld [vmem:[%s4] sm:$0x1]
    %v563 = vlaneseq
    %v564 = vshrl.u32 %v563, 7
    %v565 = vsub.s32 0, %v564
    %v566 = vrot.slane %v562, %v565
    %v567 = vadd.f32 %v484, %v566
    %v568 = vadd.f32 %v489, %v566
    %v569 = vadd.f32 %v494, %v566
    %v570 = vadd.f32 %v499, %v566
    %v571 = vadd.f32 %v504, %v566
    %v572 = vadd.f32 %v509, %v566
    %v573 = vadd.f32 %v514, %v566
    %v574 = vadd.f32 %v519, %v566
    %v575 = vadd.f32 %v524, %v566
    %v576 = vadd.f32 %v529, %v566
    %v577 = vadd.f32 %v534, %v566
    %v578 = vadd.f32 %v539, %v566
    %v579 = vadd.f32 %v544, %v566
    %v580 = vadd.f32 %v549, %v566
    %v581 = vadd.f32 %v554, %v566
    %v582 = vadd.f32 %v559, %v566
    %v583 = vmax.f32 %v567, 0.0
    %v584 = vmax.f32 %v568, 0.0
    %v585 = vmax.f32 %v569, 0.0
    %v586 = vmax.f32 %v570, 0.0
    %v587 = vmax.f32 %v571, 0.0
    %v588 = vmax.f32 %v572, 0.0
    %v589 = vmax.f32 %v573, 0.0
    %v590 = vmax.f32 %v574, 0.0
    %v591 = vmax.f32 %v575, 0.0
    %v592 = vmax.f32 %v576, 0.0
    %v593 = vmax.f32 %v577, 0.0
    %v594 = vmax.f32 %v578, 0.0
    %v595 = vmax.f32 %v579, 0.0
    %v596 = vmax.f32 %v580, 0.0
    %v597 = vmax.f32 %v581, 0.0
    %v598 = vmax.f32 %v582, 0.0
    %599 = vmatprep.subr.mxu0 0.0
    %600 = vmatpush1.msra.mxu0 %v583
    %601 = vmatprep.subr.mxu0 0.0
    %602 = vmatpush1.msra.mxu0 %v584
    %603 = vmatprep.subr.mxu0 0.0
    %604 = vmatpush1.msra.mxu0 %v585
    %605 = vmatprep.subr.mxu0 0.0
    %606 = vmatpush1.msra.mxu0 %v586
    %607 = vmatprep.subr.mxu0 0.0
    %608 = vmatpush1.msra.mxu0 %v587
    %609 = vmatprep.subr.mxu0 0.0
    %610 = vmatpush1.msra.mxu0 %v588
    %611 = vmatprep.subr.mxu0 0.0
    %612 = vmatpush1.msra.mxu0 %v589
    %613 = vmatprep.subr.mxu0 0.0
    %614 = vmatpush1.msra.mxu0 %v590
    %615 = vmatprep.subr.mxu0 0.0
    %616 = vmatpush1.msra.mxu0 %v591
    %617 = vmatprep.subr.mxu0 0.0
    %618 = vmatpush1.msra.mxu0 %v592
    %619 = vmatprep.subr.mxu0 0.0
    %620 = vmatpush1.msra.mxu0 %v593
    %621 = vmatprep.subr.mxu0 0.0
    %622 = vmatpush1.msra.mxu0 %v594
    %623 = vmatprep.subr.mxu0 0.0
    %624 = vmatpush1.msra.mxu0 %v595
    %625 = vmatprep.subr.mxu0 0.0
    %626 = vmatpush1.msra.mxu0 %v596
    %627 = vmatprep.subr.mxu0 0.0
    %628 = vmatpush1.msra.mxu0 %v597
    %629 = vmatprep.subr.mxu0 0.0
    %630 = vmatpush1.msra.mxu0 %v598
    %631 = vmatprep.subr.mxu0 0.0
    %632 = vmatpush1.msra.mxu0 0.0
    %633 = vmatprep.subr.mxu0 0.0
    %634 = vmatpush1.msra.mxu0 0.0
    %635 = vmatprep.subr.mxu0 0.0
    %636 = vmatpush1.msra.mxu0 0.0
    %637 = vmatprep.subr.mxu0 0.0
    %638 = vmatpush1.msra.mxu0 0.0
    %639 = vmatprep.subr.mxu0 0.0
    %640 = vmatpush1.msra.mxu0 0.0
    %641 = vmatprep.subr.mxu0 0.0
    %642 = vmatpush1.msra.mxu0 0.0
    %643 = vmatprep.subr.mxu0 0.0
    %644 = vmatpush1.msra.mxu0 0.0
    %645 = vmatprep.subr.mxu0 0.0
    %646 = vmatpush1.msra.mxu0 0.0
    %647 = vmatprep.subr.mxu0 0.0
    %648 = vmatpush1.msra.mxu0 0.0
    %649 = vmatprep.subr.mxu0 0.0
    %650 = vmatpush1.msra.mxu0 0.0
    %651 = vmatprep.subr.mxu0 0.0
    %652 = vmatpush1.msra.mxu0 0.0
    %653 = vmatprep.subr.mxu0 0.0
    %654 = vmatpush1.msra.mxu0 0.0
    %655 = vmatprep.subr.mxu0 0.0
    %656 = vmatpush1.msra.mxu0 0.0
    %657 = vmatprep.subr.mxu0 0.0
    %658 = vmatpush1.msra.mxu0 0.0
    %659 = vmatprep.subr.mxu0 0.0
    %660 = vmatpush1.msra.mxu0 0.0
    %661 = vmatprep.subr.mxu0 0.0
    %662 = vmatpush1.msra.mxu0 0.0
    %663 = vmatprep.mubr.f32.mxu0 0.0
    %664 = vmatmul.mubr.f32.gmra.mrb[0].mxu0 %v62
    %v665 = vpop.f32.mrb[0].mxu0
    %v666 = vadd.f32 0.0, %v665
    %v667 = vpop.f32.mrb[0].mxu0
    %668 = vmatprep.mubr.f32.mxu0 0.0
    %669 = vmatmul.mubr.f32.gmra.mrb[0].mxu0 %v63
    %v670 = vpop.f32.mrb[0].mxu0
    %v671 = vadd.f32 0.0, %v670
    %v672 = vpop.f32.mrb[0].mxu0
    %673 = vmatprep.mubr.f32.mxu0 0.0
    %674 = vmatmul.mubr.f32.gmra.mrb[0].mxu0 %v64
    %v675 = vpop.f32.mrb[0].mxu0
    %v676 = vadd.f32 0.0, %v675
    %v677 = vpop.f32.mrb[0].mxu0
    %678 = vmatprep.mubr.f32.mxu0 0.0
    %679 = vmatmul.mubr.f32.gmra.mrb[0].mxu0 %v65
    %v680 = vpop.f32.mrb[0].mxu0
    %v681 = vadd.f32 0.0, %v680
    %v682 = vpop.f32.mrb[0].mxu0
    %683 = vmatprep.mubr.f32.mxu0 0.0
    %684 = vmatmul.mubr.f32.gmra.mrb[0].mxu0 %v66
    %v685 = vpop.f32.mrb[0].mxu0
    %v686 = vadd.f32 0.0, %v685
    %v687 = vpop.f32.mrb[0].mxu0
    %688 = vmatprep.mubr.f32.mxu0 0.0
    %689 = vmatmul.mubr.f32.gmra.mrb[0].mxu0 %v67
    %v690 = vpop.f32.mrb[0].mxu0
    %v691 = vadd.f32 0.0, %v690
    %v692 = vpop.f32.mrb[0].mxu0
    %693 = vmatprep.mubr.f32.mxu0 0.0
    %694 = vmatmul.mubr.f32.gmra.mrb[0].mxu0 %v68
    %v695 = vpop.f32.mrb[0].mxu0
    %v696 = vadd.f32 0.0, %v695
    %v697 = vpop.f32.mrb[0].mxu0
    %698 = vmatprep.mubr.f32.mxu0 0.0
    %699 = vmatmul.mubr.f32.gmra.mrb[0].mxu0 %v69
    %v700 = vpop.f32.mrb[0].mxu0
    %v701 = vadd.f32 0.0, %v700
    %v702 = vpop.f32.mrb[0].mxu0
    %703 = vmatprep.mubr.f32.mxu0 0.0
    %704 = vmatmul.mubr.f32.gmra.mrb[0].mxu0 %v70
    %v705 = vpop.f32.mrb[0].mxu0
    %v706 = vadd.f32 0.0, %v705
    %v707 = vpop.f32.mrb[0].mxu0
    %708 = vmatprep.mubr.f32.mxu0 0.0
    %709 = vmatmul.mubr.f32.gmra.mrb[0].mxu0 %v71
    %v710 = vpop.f32.mrb[0].mxu0
    %v711 = vadd.f32 0.0, %v710
    %v712 = vpop.f32.mrb[0].mxu0
    %713 = vmatprep.mubr.f32.mxu0 0.0
    %714 = vmatmul.mubr.f32.gmra.mrb[0].mxu0 %v72
    %v715 = vpop.f32.mrb[0].mxu0
    %v716 = vadd.f32 0.0, %v715
    %v717 = vpop.f32.mrb[0].mxu0
    %718 = vmatprep.mubr.f32.mxu0 0.0
    %719 = vmatmul.mubr.f32.gmra.mrb[0].mxu0 %v73
    %v720 = vpop.f32.mrb[0].mxu0
    %v721 = vadd.f32 0.0, %v720
    %v722 = vpop.f32.mrb[0].mxu0
    %723 = vmatprep.mubr.f32.mxu0 0.0
    %724 = vmatmul.mubr.f32.gmra.mrb[0].mxu0 %v74
    %v725 = vpop.f32.mrb[0].mxu0
    %v726 = vadd.f32 0.0, %v725
    %v727 = vpop.f32.mrb[0].mxu0
    %728 = vmatprep.mubr.f32.mxu0 0.0
    %729 = vmatmul.mubr.f32.gmra.mrb[0].mxu0 %v75
    %v730 = vpop.f32.mrb[0].mxu0
    %v731 = vadd.f32 0.0, %v730
    %v732 = vpop.f32.mrb[0].mxu0
    %733 = vmatprep.mubr.f32.mxu0 0.0
    %734 = vmatmul.mubr.f32.gmra.mrb[0].mxu0 %v76
    %v735 = vpop.f32.mrb[0].mxu0
    %v736 = vadd.f32 0.0, %v735
    %v737 = vpop.f32.mrb[0].mxu0
    %738 = vmatprep.mubr.f32.mxu0 0.0
    %739 = vmatmul.mubr.f32.gmra.mrb[0].mxu0 %v77
    %v740 = vpop.f32.mrb[0].mxu0
    %v741 = vadd.f32 0.0, %v740
    %v742 = vpop.f32.mrb[0].mxu0
    %743 = vdwg.mxu0
    %s744 = scalar_lea.vmem [#allocation7], 256
    %v745 = vld [vmem:[%s744] sm:$0xff]
    %v746 = vld [vmem:[%s744 + $0x8] sm:$0xff]
    %v747 = vld [vmem:[%s744 + $0x10] sm:$0xff]
    %v748 = vld [vmem:[%s744 + $0x18] sm:$0xff]
    %v749 = vld [vmem:[%s744 + $0x20] sm:$0xff]
    %v750 = vld [vmem:[%s744 + $0x28] sm:$0xff]
    %v751 = vld [vmem:[%s744 + $0x30] sm:$0xff]
    %v752 = vld [vmem:[%s744 + $0x38] sm:$0xff]
    %v753 = vld [vmem:[%s744 + $0x40] sm:$0xff]
    %v754 = vld [vmem:[%s744 + $0x48] sm:$0xff]
    %v755 = vld [vmem:[%s744 + $0x50] sm:$0xff]
    %v756 = vld [vmem:[%s744 + $0x58] sm:$0xff]
    %v757 = vld [vmem:[%s744 + $0x60] sm:$0xff]
    %v758 = vld [vmem:[%s744 + $0x68] sm:$0xff]
    %v759 = vld [vmem:[%s744 + $0x70] sm:$0xff]
    %v760 = vld [vmem:[%s744 + $0x78] sm:$0xff]
    %s761 = scalar_lea.vmem [#allocation7], 384
    %v762 = vld [vmem:[%s761] sm:$0xff]
    %v763 = vld [vmem:[%s761 + $0x8] sm:$0xff]
    %v764 = vld [vmem:[%s761 + $0x10] sm:$0xff]
    %v765 = vld [vmem:[%s761 + $0x18] sm:$0xff]
    %v766 = vld [vmem:[%s761 + $0x20] sm:$0xff]
    %v767 = vld [vmem:[%s761 + $0x28] sm:$0xff]
    %v768 = vld [vmem:[%s761 + $0x30] sm:$0xff]
    %v769 = vld [vmem:[%s761 + $0x38] sm:$0xff]
    %v770 = vld [vmem:[%s761 + $0x40] sm:$0xff]
    %v771 = vld [vmem:[%s761 + $0x48] sm:$0xff]
    %v772 = vld [vmem:[%s761 + $0x50] sm:$0xff]
    %v773 = vld [vmem:[%s761 + $0x58] sm:$0xff]
    %v774 = vld [vmem:[%s761 + $0x60] sm:$0xff]
    %v775 = vld [vmem:[%s761 + $0x68] sm:$0xff]
    %v776 = vld [vmem:[%s761 + $0x70] sm:$0xff]
    %v777 = vld [vmem:[%s761 + $0x78] sm:$0xff]
    %778 = vmatprep.subr.mxu0 0.0
    %779 = vmatpush1.msra.mxu0 %v762
    %780 = vmatprep.subr.mxu0 0.0
    %781 = vmatpush1.msra.mxu0 %v763
    %782 = vmatprep.subr.mxu0 0.0
    %783 = vmatpush1.msra.mxu0 %v764
    %784 = vmatprep.subr.mxu0 0.0
    %785 = vmatpush1.msra.mxu0 %v765
    %786 = vmatprep.subr.mxu0 0.0
    %787 = vmatpush1.msra.mxu0 %v766
    %788 = vmatprep.subr.mxu0 0.0
    %789 = vmatpush1.msra.mxu0 %v767
    %790 = vmatprep.subr.mxu0 0.0
    %791 = vmatpush1.msra.mxu0 %v768
    %792 = vmatprep.subr.mxu0 0.0
    %793 = vmatpush1.msra.mxu0 %v769
    %794 = vmatprep.subr.mxu0 0.0
    %795 = vmatpush1.msra.mxu0 %v770
    %796 = vmatprep.subr.mxu0 0.0
    %797 = vmatpush1.msra.mxu0 %v771
    %798 = vmatprep.subr.mxu0 0.0
    %799 = vmatpush1.msra.mxu0 %v772
    %800 = vmatprep.subr.mxu0 0.0
    %801 = vmatpush1.msra.mxu0 %v773
    %802 = vmatprep.subr.mxu0 0.0
    %803 = vmatpush1.msra.mxu0 %v774
    %804 = vmatprep.subr.mxu0 0.0
    %805 = vmatpush1.msra.mxu0 %v775
    %806 = vmatprep.subr.mxu0 0.0
    %807 = vmatpush1.msra.mxu0 %v776
    %808 = vmatprep.subr.mxu0 0.0
    %809 = vmatpush1.msra.mxu0 %v777
    %810 = vmatprep.subr.mxu0 0.0
    %811 = vmatpush1.msra.mxu0 0.0
    %812 = vmatprep.subr.mxu0 0.0
    %813 = vmatpush1.msra.mxu0 0.0
    %814 = vmatprep.subr.mxu0 0.0
    %815 = vmatpush1.msra.mxu0 0.0
    %816 = vmatprep.subr.mxu0 0.0
    %817 = vmatpush1.msra.mxu0 0.0
    %818 = vmatprep.subr.mxu0 0.0
    %819 = vmatpush1.msra.mxu0 0.0
    %820 = vmatprep.subr.mxu0 0.0
    %821 = vmatpush1.msra.mxu0 0.0
    %822 = vmatprep.subr.mxu0 0.0
    %823 = vmatpush1.msra.mxu0 0.0
    %824 = vmatprep.subr.mxu0 0.0
    %825 = vmatpush1.msra.mxu0 0.0
    %826 = vmatprep.subr.mxu0 0.0
    %827 = vmatpush1.msra.mxu0 0.0
    %828 = vmatprep.subr.mxu0 0.0
    %829 = vmatpush1.msra.mxu0 0.0
    %830 = vmatprep.subr.mxu0 0.0
    %831 = vmatpush1.msra.mxu0 0.0
    %832 = vmatprep.subr.mxu0 0.0
    %833 = vmatpush1.msra.mxu0 0.0
    %834 = vmatprep.subr.mxu0 0.0
    %835 = vmatpush1.msra.mxu0 0.0
    %836 = vmatprep.subr.mxu0 0.0
    %837 = vmatpush1.msra.mxu0 0.0
    %838 = vmatprep.subr.mxu0 0.0
    %839 = vmatpush1.msra.mxu0 0.0
    %840 = vmatprep.subr.mxu0 0.0
    %841 = vmatpush1.msra.mxu0 0.0
    %842 = vmatprep.mubr.f32.mxu0 0.0
    %843 = vmatmul.mubr.f32.gmra.mrb[0].mxu0 %v583
    %v844 = vpop.f32.mrb[0].mxu0
    %v845 = vadd.f32 0.0, %v844
    %v846 = vpop.f32.mrb[0].mxu0
    %847 = vmatprep.mubr.f32.mxu0 0.0
    %848 = vmatmul.mubr.f32.gmra.mrb[0].mxu0 %v584
    %v849 = vpop.f32.mrb[0].mxu0
    %v850 = vadd.f32 0.0, %v849
    %v851 = vpop.f32.mrb[0].mxu0
    %852 = vmatprep.mubr.f32.mxu0 0.0
    %853 = vmatmul.mubr.f32.gmra.mrb[0].mxu0 %v585
    %v854 = vpop.f32.mrb[0].mxu0
    %v855 = vadd.f32 0.0, %v854
    %v856 = vpop.f32.mrb[0].mxu0
    %857 = vmatprep.mubr.f32.mxu0 0.0
    %858 = vmatmul.mubr.f32.gmra.mrb[0].mxu0 %v586
    %v859 = vpop.f32.mrb[0].mxu0
    %v860 = vadd.f32 0.0, %v859
    %v861 = vpop.f32.mrb[0].mxu0
    %862 = vmatprep.mubr.f32.mxu0 0.0
    %863 = vmatmul.mubr.f32.gmra.mrb[0].mxu0 %v587
    %v864 = vpop.f32.mrb[0].mxu0
    %v865 = vadd.f32 0.0, %v864
    %v866 = vpop.f32.mrb[0].mxu0
    %867 = vmatprep.mubr.f32.mxu0 0.0
    %868 = vmatmul.mubr.f32.gmra.mrb[0].mxu0 %v588
    %v869 = vpop.f32.mrb[0].mxu0
    %v870 = vadd.f32 0.0, %v869
    %v871 = vpop.f32.mrb[0].mxu0
    %872 = vmatprep.mubr.f32.mxu0 0.0
    %873 = vmatmul.mubr.f32.gmra.mrb[0].mxu0 %v589
    %v874 = vpop.f32.mrb[0].mxu0
    %v875 = vadd.f32 0.0, %v874
    %v876 = vpop.f32.mrb[0].mxu0
    %877 = vmatprep.mubr.f32.mxu0 0.0
    %878 = vmatmul.mubr.f32.gmra.mrb[0].mxu0 %v590
    %v879 = vpop.f32.mrb[0].mxu0
    %v880 = vadd.f32 0.0, %v879
    %v881 = vpop.f32.mrb[0].mxu0
    %882 = vmatprep.mubr.f32.mxu0 0.0
    %883 = vmatmul.mubr.f32.gmra.mrb[0].mxu0 %v591
    %v884 = vpop.f32.mrb[0].mxu0
    %v885 = vadd.f32 0.0, %v884
    %v886 = vpop.f32.mrb[0].mxu0
    %887 = vmatprep.mubr.f32.mxu0 0.0
    %888 = vmatmul.mubr.f32.gmra.mrb[0].mxu0 %v592
    %v889 = vpop.f32.mrb[0].mxu0
    %v890 = vadd.f32 0.0, %v889
    %v891 = vpop.f32.mrb[0].mxu0
    %892 = vmatprep.mubr.f32.mxu0 0.0
    %893 = vmatmul.mubr.f32.gmra.mrb[0].mxu0 %v593
    %v894 = vpop.f32.mrb[0].mxu0
    %v895 = vadd.f32 0.0, %v894
    %v896 = vpop.f32.mrb[0].mxu0
    %897 = vmatprep.mubr.f32.mxu0 0.0
    %898 = vmatmul.mubr.f32.gmra.mrb[0].mxu0 %v594
    %v899 = vpop.f32.mrb[0].mxu0
    %v900 = vadd.f32 0.0, %v899
    %v901 = vpop.f32.mrb[0].mxu0
    %902 = vmatprep.mubr.f32.mxu0 0.0
    %903 = vmatmul.mubr.f32.gmra.mrb[0].mxu0 %v595
    %v904 = vpop.f32.mrb[0].mxu0
    %v905 = vadd.f32 0.0, %v904
    %v906 = vpop.f32.mrb[0].mxu0
    %907 = vmatprep.mubr.f32.mxu0 0.0
    %908 = vmatmul.mubr.f32.gmra.mrb[0].mxu0 %v596
    %v909 = vpop.f32.mrb[0].mxu0
    %v910 = vadd.f32 0.0, %v909
    %v911 = vpop.f32.mrb[0].mxu0
    %912 = vmatprep.mubr.f32.mxu0 0.0
    %913 = vmatmul.mubr.f32.gmra.mrb[0].mxu0 %v597
    %v914 = vpop.f32.mrb[0].mxu0
    %v915 = vadd.f32 0.0, %v914
    %v916 = vpop.f32.mrb[0].mxu0
    %917 = vmatprep.mubr.f32.mxu0 0.0
    %918 = vmatmul.mubr.f32.gmra.mrb[0].mxu0 %v598
    %v919 = vpop.f32.mrb[0].mxu0
    %v920 = vadd.f32 0.0, %v919
    %v921 = vpop.f32.mrb[0].mxu0
    %922 = vdwg.mxu0
    %923 = vmatprep.subr.mxu0 0.0
    %924 = vmatpush1.msra.mxu0 %v745
    %925 = vmatprep.subr.mxu0 0.0
    %926 = vmatpush1.msra.mxu0 %v746
    %927 = vmatprep.subr.mxu0 0.0
    %928 = vmatpush1.msra.mxu0 %v747
    %929 = vmatprep.subr.mxu0 0.0
    %930 = vmatpush1.msra.mxu0 %v748
    %931 = vmatprep.subr.mxu0 0.0
    %932 = vmatpush1.msra.mxu0 %v749
    %933 = vmatprep.subr.mxu0 0.0
    %934 = vmatpush1.msra.mxu0 %v750
    %935 = vmatprep.subr.mxu0 0.0
    %936 = vmatpush1.msra.mxu0 %v751
    %937 = vmatprep.subr.mxu0 0.0
    %938 = vmatpush1.msra.mxu0 %v752
    %939 = vmatprep.subr.mxu0 0.0
    %940 = vmatpush1.msra.mxu0 %v753
    %941 = vmatprep.subr.mxu0 0.0
    %942 = vmatpush1.msra.mxu0 %v754
    %943 = vmatprep.subr.mxu0 0.0
    %944 = vmatpush1.msra.mxu0 %v755
    %945 = vmatprep.subr.mxu0 0.0
    %946 = vmatpush1.msra.mxu0 %v756
    %947 = vmatprep.subr.mxu0 0.0
    %948 = vmatpush1.msra.mxu0 %v757
    %949 = vmatprep.subr.mxu0 0.0
    %950 = vmatpush1.msra.mxu0 %v758
    %951 = vmatprep.subr.mxu0 0.0
    %952 = vmatpush1.msra.mxu0 %v759
    %953 = vmatprep.subr.mxu0 0.0
    %954 = vmatpush1.msra.mxu0 %v760
    %955 = vmatprep.subr.mxu0 0.0
    %956 = vmatpush1.msra.mxu0 0.0
    %957 = vmatprep.subr.mxu0 0.0
    %958 = vmatpush1.msra.mxu0 0.0
    %959 = vmatprep.subr.mxu0 0.0
    %960 = vmatpush1.msra.mxu0 0.0
    %961 = vmatprep.subr.mxu0 0.0
    %962 = vmatpush1.msra.mxu0 0.0
    %963 = vmatprep.subr.mxu0 0.0
    %964 = vmatpush1.msra.mxu0 0.0
    %965 = vmatprep.subr.mxu0 0.0
    %966 = vmatpush1.msra.mxu0 0.0
    %967 = vmatprep.subr.mxu0 0.0
    %968 = vmatpush1.msra.mxu0 0.0
    %969 = vmatprep.subr.mxu0 0.0
    %970 = vmatpush1.msra.mxu0 0.0
    %971 = vmatprep.subr.mxu0 0.0
    %972 = vmatpush1.msra.mxu0 0.0
    %973 = vmatprep.subr.mxu0 0.0
    %974 = vmatpush1.msra.mxu0 0.0
    %975 = vmatprep.subr.mxu0 0.0
    %976 = vmatpush1.msra.mxu0 0.0
    %977 = vmatprep.subr.mxu0 0.0
    %978 = vmatpush1.msra.mxu0 0.0
    %979 = vmatprep.subr.mxu0 0.0
    %980 = vmatpush1.msra.mxu0 0.0
    %981 = vmatprep.subr.mxu0 0.0
    %982 = vmatpush1.msra.mxu0 0.0
    %983 = vmatprep.subr.mxu0 0.0
    %984 = vmatpush1.msra.mxu0 0.0
    %985 = vmatprep.subr.mxu0 0.0
    %986 = vmatpush1.msra.mxu0 0.0
    %987 = vmatprep.mubr.f32.mxu0 0.0
    %988 = vmatmul.mubr.f32.gmra.mrb[0].mxu0 %v666
    %v989 = vpop.f32.mrb[0].mxu0
    %v990 = vadd.f32 %v845, %v989
    %v991 = vpop.f32.mrb[0].mxu0
    %992 = vmatprep.mubr.f32.mxu0 0.0
    %993 = vmatmul.mubr.f32.gmra.mrb[0].mxu0 %v671
    %v994 = vpop.f32.mrb[0].mxu0
    %v995 = vadd.f32 %v850, %v994
    %v996 = vpop.f32.mrb[0].mxu0
    %997 = vmatprep.mubr.f32.mxu0 0.0
    %998 = vmatmul.mubr.f32.gmra.mrb[0].mxu0 %v676
    %v999 = vpop.f32.mrb[0].mxu0
    %v1000 = vadd.f32 %v855, %v999
    %v1001 = vpop.f32.mrb[0].mxu0
    %1002 = vmatprep.mubr.f32.mxu0 0.0
    %1003 = vmatmul.mubr.f32.gmra.mrb[0].mxu0 %v681
    %v1004 = vpop.f32.mrb[0].mxu0
    %v1005 = vadd.f32 %v860, %v1004
    %v1006 = vpop.f32.mrb[0].mxu0
    %1007 = vmatprep.mubr.f32.mxu0 0.0
    %1008 = vmatmul.mubr.f32.gmra.mrb[0].mxu0 %v686
    %v1009 = vpop.f32.mrb[0].mxu0
    %v1010 = vadd.f32 %v865, %v1009
    %v1011 = vpop.f32.mrb[0].mxu0
    %1012 = vmatprep.mubr.f32.mxu0 0.0
    %1013 = vmatmul.mubr.f32.gmra.mrb[0].mxu0 %v691
    %v1014 = vpop.f32.mrb[0].mxu0
    %v1015 = vadd.f32 %v870, %v1014
    %v1016 = vpop.f32.mrb[0].mxu0
    %1017 = vmatprep.mubr.f32.mxu0 0.0
    %1018 = vmatmul.mubr.f32.gmra.mrb[0].mxu0 %v696
    %v1019 = vpop.f32.mrb[0].mxu0
    %v1020 = vadd.f32 %v875, %v1019
    %v1021 = vpop.f32.mrb[0].mxu0
    %1022 = vmatprep.mubr.f32.mxu0 0.0
    %1023 = vmatmul.mubr.f32.gmra.mrb[0].mxu0 %v701
    %v1024 = vpop.f32.mrb[0].mxu0
    %v1025 = vadd.f32 %v880, %v1024
    %v1026 = vpop.f32.mrb[0].mxu0
    %1027 = vmatprep.mubr.f32.mxu0 0.0
    %1028 = vmatmul.mubr.f32.gmra.mrb[0].mxu0 %v706
    %v1029 = vpop.f32.mrb[0].mxu0
    %v1030 = vadd.f32 %v885, %v1029
    %v1031 = vpop.f32.mrb[0].mxu0
    %1032 = vmatprep.mubr.f32.mxu0 0.0
    %1033 = vmatmul.mubr.f32.gmra.mrb[0].mxu0 %v711
    %v1034 = vpop.f32.mrb[0].mxu0
    %v1035 = vadd.f32 %v890, %v1034
    %v1036 = vpop.f32.mrb[0].mxu0
    %1037 = vmatprep.mubr.f32.mxu0 0.0
    %1038 = vmatmul.mubr.f32.gmra.mrb[0].mxu0 %v716
    %v1039 = vpop.f32.mrb[0].mxu0
    %v1040 = vadd.f32 %v895, %v1039
    %v1041 = vpop.f32.mrb[0].mxu0
    %1042 = vmatprep.mubr.f32.mxu0 0.0
    %1043 = vmatmul.mubr.f32.gmra.mrb[0].mxu0 %v721
    %v1044 = vpop.f32.mrb[0].mxu0
    %v1045 = vadd.f32 %v900, %v1044
    %v1046 = vpop.f32.mrb[0].mxu0
    %1047 = vmatprep.mubr.f32.mxu0 0.0
    %1048 = vmatmul.mubr.f32.gmra.mrb[0].mxu0 %v726
    %v1049 = vpop.f32.mrb[0].mxu0
    %v1050 = vadd.f32 %v905, %v1049
    %v1051 = vpop.f32.mrb[0].mxu0
    %1052 = vmatprep.mubr.f32.mxu0 0.0
    %1053 = vmatmul.mubr.f32.gmra.mrb[0].mxu0 %v731
    %v1054 = vpop.f32.mrb[0].mxu0
    %v1055 = vadd.f32 %v910, %v1054
    %v1056 = vpop.f32.mrb[0].mxu0
    %1057 = vmatprep.mubr.f32.mxu0 0.0
    %1058 = vmatmul.mubr.f32.gmra.mrb[0].mxu0 %v736
    %v1059 = vpop.f32.mrb[0].mxu0
    %v1060 = vadd.f32 %v915, %v1059
    %v1061 = vpop.f32.mrb[0].mxu0
    %1062 = vmatprep.mubr.f32.mxu0 0.0
    %1063 = vmatmul.mubr.f32.gmra.mrb[0].mxu0 %v741
    %v1064 = vpop.f32.mrb[0].mxu0
    %v1065 = vadd.f32 %v920, %v1064
    %v1066 = vpop.f32.mrb[0].mxu0
    %1067 = vdwg.mxu0
    %v1068 = vld [vmem:[%s4 + $0x1] sm:$0x1]
    %v1069 = vlaneseq
    %v1070 = vshrl.u32 %v1069, 7
    %v1071 = vsub.s32 0, %v1070
    %v1072 = vrot.slane %v1068, %v1071
    %v1073 = vadd.f32 %v990, %v1072
    %v1074 = vadd.f32 %v995, %v1072
    %v1075 = vadd.f32 %v1000, %v1072
    %v1076 = vadd.f32 %v1005, %v1072
    %v1077 = vadd.f32 %v1010, %v1072
    %v1078 = vadd.f32 %v1015, %v1072
    %v1079 = vadd.f32 %v1020, %v1072
    %v1080 = vadd.f32 %v1025, %v1072
    %v1081 = vadd.f32 %v1030, %v1072
    %v1082 = vadd.f32 %v1035, %v1072
    %v1083 = vadd.f32 %v1040, %v1072
    %v1084 = vadd.f32 %v1045, %v1072
    %v1085 = vadd.f32 %v1050, %v1072
    %v1086 = vadd.f32 %v1055, %v1072
    %v1087 = vadd.f32 %v1060, %v1072
    %v1088 = vadd.f32 %v1065, %v1072
    %v1089 = vmax.f32 %v1073, 0.0
    %v1090 = vmax.f32 %v1074, 0.0
    %v1091 = vmax.f32 %v1075, 0.0
    %v1092 = vmax.f32 %v1076, 0.0
    %v1093 = vmax.f32 %v1077, 0.0
    %v1094 = vmax.f32 %v1078, 0.0
    %v1095 = vmax.f32 %v1079, 0.0
    %v1096 = vmax.f32 %v1080, 0.0
    %v1097 = vmax.f32 %v1081, 0.0
    %v1098 = vmax.f32 %v1082, 0.0
    %v1099 = vmax.f32 %v1083, 0.0
    %v1100 = vmax.f32 %v1084, 0.0
    %v1101 = vmax.f32 %v1085, 0.0
    %v1102 = vmax.f32 %v1086, 0.0
    %v1103 = vmax.f32 %v1087, 0.0
    %v1104 = vmax.f32 %v1088, 0.0
    %v1105 = vld [vmem:[%s2] sm:$0x1]
    %1106 = vmatprep.subr.mxu0 0.0
    %1107 = vmatpush1.msra.mxu0 %v1089
    %1108 = vmatprep.subr.mxu0 0.0
    %1109 = vmatpush1.msra.mxu0 %v1090
    %1110 = vmatprep.subr.mxu0 0.0
    %1111 = vmatpush1.msra.mxu0 %v1091
    %1112 = vmatprep.subr.mxu0 0.0
    %1113 = vmatpush1.msra.mxu0 %v1092
    %1114 = vmatprep.subr.mxu0 0.0
    %1115 = vmatpush1.msra.mxu0 %v1093
    %1116 = vmatprep.subr.mxu0 0.0
    %1117 = vmatpush1.msra.mxu0 %v1094
    %1118 = vmatprep.subr.mxu0 0.0
    %1119 = vmatpush1.msra.mxu0 %v1095
    %1120 = vmatprep.subr.mxu0 0.0
    %1121 = vmatpush1.msra.mxu0 %v1096
    %1122 = vmatprep.subr.mxu0 0.0
    %1123 = vmatpush1.msra.mxu0 %v1097
    %1124 = vmatprep.subr.mxu0 0.0
    %1125 = vmatpush1.msra.mxu0 %v1098
    %1126 = vmatprep.subr.mxu0 0.0
    %1127 = vmatpush1.msra.mxu0 %v1099
    %1128 = vmatprep.subr.mxu0 0.0
    %1129 = vmatpush1.msra.mxu0 %v1100
    %1130 = vmatprep.subr.mxu0 0.0
    %1131 = vmatpush1.msra.mxu0 %v1101
    %1132 = vmatprep.subr.mxu0 0.0
    %1133 = vmatpush1.msra.mxu0 %v1102
    %1134 = vmatprep.subr.mxu0 0.0
    %1135 = vmatpush1.msra.mxu0 %v1103
    %1136 = vmatprep.subr.mxu0 0.0
    %1137 = vmatpush1.msra.mxu0 %v1104
    %1138 = vmatprep.subr.mxu0 0.0
    %1139 = vmatpush1.msra.mxu0 0.0
    %1140 = vmatprep.subr.mxu0 0.0
    %1141 = vmatpush1.msra.mxu0 0.0
    %1142 = vmatprep.subr.mxu0 0.0
    %1143 = vmatpush1.msra.mxu0 0.0
    %1144 = vmatprep.subr.mxu0 0.0
    %1145 = vmatpush1.msra.mxu0 0.0
    %1146 = vmatprep.subr.mxu0 0.0
    %1147 = vmatpush1.msra.mxu0 0.0
    %1148 = vmatprep.subr.mxu0 0.0
    %1149 = vmatpush1.msra.mxu0 0.0
    %1150 = vmatprep.subr.mxu0 0.0
    %1151 = vmatpush1.msra.mxu0 0.0
    %1152 = vmatprep.subr.mxu0 0.0
    %1153 = vmatpush1.msra.mxu0 0.0
    %1154 = vmatprep.subr.mxu0 0.0
    %1155 = vmatpush1.msra.mxu0 0.0
    %1156 = vmatprep.subr.mxu0 0.0
    %1157 = vmatpush1.msra.mxu0 0.0
    %1158 = vmatprep.subr.mxu0 0.0
    %1159 = vmatpush1.msra.mxu0 0.0
    %1160 = vmatprep.subr.mxu0 0.0
    %1161 = vmatpush1.msra.mxu0 0.0
    %1162 = vmatprep.subr.mxu0 0.0
    %1163 = vmatpush1.msra.mxu0 0.0
    %1164 = vmatprep.subr.mxu0 0.0
    %1165 = vmatpush1.msra.mxu0 0.0
    %1166 = vmatprep.subr.mxu0 0.0
    %1167 = vmatpush1.msra.mxu0 0.0
    %1168 = vmatprep.subr.mxu0 0.0
    %1169 = vmatpush1.msra.mxu0 0.0
    %1170 = vmatprep.mubr.f32.mxu0 0.0
    %1171 = vmatmul.mubr.f32.gmra.mrb[0].mxu0 %v1105
    %v1172 = vpop.f32.mrb[0].mxu0
    %v1173 = vadd.f32 0.0, %v1172
    %v1174 = vpop.f32.mrb[0].mxu0
    %1175 = vdwg.mxu0
    %s1176 = scalar_lea.vmem [#allocation7], 512
    %v1177 = vld [vmem:[%s1176] sm:$0xff]
    %v1178 = vld [vmem:[%s1176 + $0x8] sm:$0xff]
    %v1179 = vld [vmem:[%s1176 + $0x10] sm:$0xff]
    %v1180 = vld [vmem:[%s1176 + $0x18] sm:$0xff]
    %v1181 = vld [vmem:[%s1176 + $0x20] sm:$0xff]
    %v1182 = vld [vmem:[%s1176 + $0x28] sm:$0xff]
    %v1183 = vld [vmem:[%s1176 + $0x30] sm:$0xff]
    %v1184 = vld [vmem:[%s1176 + $0x38] sm:$0xff]
    %v1185 = vld [vmem:[%s1176 + $0x40] sm:$0xff]
    %v1186 = vld [vmem:[%s1176 + $0x48] sm:$0xff]
    %v1187 = vld [vmem:[%s1176 + $0x50] sm:$0xff]
    %v1188 = vld [vmem:[%s1176 + $0x58] sm:$0xff]
    %v1189 = vld [vmem:[%s1176 + $0x60] sm:$0xff]
    %v1190 = vld [vmem:[%s1176 + $0x68] sm:$0xff]
    %v1191 = vld [vmem:[%s1176 + $0x70] sm:$0xff]
    %v1192 = vld [vmem:[%s1176 + $0x78] sm:$0xff]
    %v1193 = vld [vmem:[%s4 + $0x2] sm:$0x1]
    %1194 = vmatprep.subr.mxu0 0.0
    %1195 = vmatpush1.msra.mxu0 %v1177
    %1196 = vmatprep.subr.mxu0 0.0
    %1197 = vmatpush1.msra.mxu0 %v1178
    %1198 = vmatprep.subr.mxu0 0.0
    %1199 = vmatpush1.msra.mxu0 %v1179
    %1200 = vmatprep.subr.mxu0 0.0
    %1201 = vmatpush1.msra.mxu0 %v1180
    %1202 = vmatprep.subr.mxu0 0.0
    %1203 = vmatpush1.msra.mxu0 %v1181
    %1204 = vmatprep.subr.mxu0 0.0
    %1205 = vmatpush1.msra.mxu0 %v1182
    %1206 = vmatprep.subr.mxu0 0.0
    %1207 = vmatpush1.msra.mxu0 %v1183
    %1208 = vmatprep.subr.mxu0 0.0
    %1209 = vmatpush1.msra.mxu0 %v1184
    %1210 = vmatprep.subr.mxu0 0.0
    %1211 = vmatpush1.msra.mxu0 %v1185
    %1212 = vmatprep.subr.mxu0 0.0
    %1213 = vmatpush1.msra.mxu0 %v1186
    %1214 = vmatprep.subr.mxu0 0.0
    %1215 = vmatpush1.msra.mxu0 %v1187
    %1216 = vmatprep.subr.mxu0 0.0
    %1217 = vmatpush1.msra.mxu0 %v1188
    %1218 = vmatprep.subr.mxu0 0.0
    %1219 = vmatpush1.msra.mxu0 %v1189
    %1220 = vmatprep.subr.mxu0 0.0
    %1221 = vmatpush1.msra.mxu0 %v1190
    %1222 = vmatprep.subr.mxu0 0.0
    %1223 = vmatpush1.msra.mxu0 %v1191
    %1224 = vmatprep.subr.mxu0 0.0
    %1225 = vmatpush1.msra.mxu0 %v1192
    %1226 = vmatprep.subr.mxu0 0.0
    %1227 = vmatpush1.msra.mxu0 0.0
    %1228 = vmatprep.subr.mxu0 0.0
    %1229 = vmatpush1.msra.mxu0 0.0
    %1230 = vmatprep.subr.mxu0 0.0
    %1231 = vmatpush1.msra.mxu0 0.0
    %1232 = vmatprep.subr.mxu0 0.0
    %1233 = vmatpush1.msra.mxu0 0.0
    %1234 = vmatprep.subr.mxu0 0.0
    %1235 = vmatpush1.msra.mxu0 0.0
    %1236 = vmatprep.subr.mxu0 0.0
    %1237 = vmatpush1.msra.mxu0 0.0
    %1238 = vmatprep.subr.mxu0 0.0
    %1239 = vmatpush1.msra.mxu0 0.0
    %1240 = vmatprep.subr.mxu0 0.0
    %1241 = vmatpush1.msra.mxu0 0.0
    %1242 = vmatprep.subr.mxu0 0.0
    %1243 = vmatpush1.msra.mxu0 0.0
    %1244 = vmatprep.subr.mxu0 0.0
    %1245 = vmatpush1.msra.mxu0 0.0
    %1246 = vmatprep.subr.mxu0 0.0
    %1247 = vmatpush1.msra.mxu0 0.0
    %1248 = vmatprep.subr.mxu0 0.0
    %1249 = vmatpush1.msra.mxu0 0.0
    %1250 = vmatprep.subr.mxu0 0.0
    %1251 = vmatpush1.msra.mxu0 0.0
    %1252 = vmatprep.subr.mxu0 0.0
    %1253 = vmatpush1.msra.mxu0 0.0
    %1254 = vmatprep.subr.mxu0 0.0
    %1255 = vmatpush1.msra.mxu0 0.0
    %1256 = vmatprep.subr.mxu0 0.0
    %1257 = vmatpush1.msra.mxu0 0.0
    %1258 = vmatprep.mubr.f32.mxu0 0.0
    %1259 = vmatmul.mubr.f32.gmra.mrb[0].mxu0 %v1173
    %v1260 = vpop.f32.mrb[0].mxu0
    %v1261 = vadd.f32 %v1193, %v1260
    %v1262 = vpop.f32.mrb[0].mxu0
    %1263 = vdwg.mxu0
    %v1264 = vmax.f32 %v1261, 0.0
    %s1265 = scalar_lea.vmem [#allocation7], 640
    %v1266 = vld [vmem:[%s1265] sm:$0xff]
    %v1267 = vld [vmem:[%s1265 + $0x8] sm:$0xff]
    %v1268 = vld [vmem:[%s1265 + $0x10] sm:$0xff]
    %v1269 = vld [vmem:[%s1265 + $0x18] sm:$0xff]
    %v1270 = vld [vmem:[%s1265 + $0x20] sm:$0xff]
    %v1271 = vld [vmem:[%s1265 + $0x28] sm:$0xff]
    %v1272 = vld [vmem:[%s1265 + $0x30] sm:$0xff]
    %v1273 = vld [vmem:[%s1265 + $0x38] sm:$0xff]
    %v1274 = vld [vmem:[%s1265 + $0x40] sm:$0xff]
    %v1275 = vld [vmem:[%s1265 + $0x48] sm:$0xff]
    %v1276 = vld [vmem:[%s1265 + $0x50] sm:$0xff]
    %v1277 = vld [vmem:[%s1265 + $0x58] sm:$0xff]
    %v1278 = vld [vmem:[%s1265 + $0x60] sm:$0xff]
    %v1279 = vld [vmem:[%s1265 + $0x68] sm:$0xff]
    %v1280 = vld [vmem:[%s1265 + $0x70] sm:$0xff]
    %v1281 = vld [vmem:[%s1265 + $0x78] sm:$0xff]
    %v1282 = vld [vmem:[%s4 + $0x3] sm:$0x1]
    %1283 = vmatprep.subr.mxu0 0.0
    %1284 = vmatpush1.msra.mxu0 %v1266
    %1285 = vmatprep.subr.mxu0 0.0
    %1286 = vmatpush1.msra.mxu0 %v1267
    %1287 = vmatprep.subr.mxu0 0.0
    %1288 = vmatpush1.msra.mxu0 %v1268
    %1289 = vmatprep.subr.mxu0 0.0
    %1290 = vmatpush1.msra.mxu0 %v1269
    %1291 = vmatprep.subr.mxu0 0.0
    %1292 = vmatpush1.msra.mxu0 %v1270
    %1293 = vmatprep.subr.mxu0 0.0
    %1294 = vmatpush1.msra.mxu0 %v1271
    %1295 = vmatprep.subr.mxu0 0.0
    %1296 = vmatpush1.msra.mxu0 %v1272
    %1297 = vmatprep.subr.mxu0 0.0
    %1298 = vmatpush1.msra.mxu0 %v1273
    %1299 = vmatprep.subr.mxu0 0.0
    %1300 = vmatpush1.msra.mxu0 %v1274
    %1301 = vmatprep.subr.mxu0 0.0
    %1302 = vmatpush1.msra.mxu0 %v1275
    %1303 = vmatprep.subr.mxu0 0.0
    %1304 = vmatpush1.msra.mxu0 %v1276
    %1305 = vmatprep.subr.mxu0 0.0
    %1306 = vmatpush1.msra.mxu0 %v1277
    %1307 = vmatprep.subr.mxu0 0.0
    %1308 = vmatpush1.msra.mxu0 %v1278
    %1309 = vmatprep.subr.mxu0 0.0
    %1310 = vmatpush1.msra.mxu0 %v1279
    %1311 = vmatprep.subr.mxu0 0.0
    %1312 = vmatpush1.msra.mxu0 %v1280
    %1313 = vmatprep.subr.mxu0 0.0
    %1314 = vmatpush1.msra.mxu0 %v1281
    %1315 = vmatprep.subr.mxu0 0.0
    %1316 = vmatpush1.msra.mxu0 0.0
    %1317 = vmatprep.subr.mxu0 0.0
    %1318 = vmatpush1.msra.mxu0 0.0
    %1319 = vmatprep.subr.mxu0 0.0
    %1320 = vmatpush1.msra.mxu0 0.0
    %1321 = vmatprep.subr.mxu0 0.0
    %1322 = vmatpush1.msra.mxu0 0.0
    %1323 = vmatprep.subr.mxu0 0.0
    %1324 = vmatpush1.msra.mxu0 0.0
    %1325 = vmatprep.subr.mxu0 0.0
    %1326 = vmatpush1.msra.mxu0 0.0
    %1327 = vmatprep.subr.mxu0 0.0
    %1328 = vmatpush1.msra.mxu0 0.0
    %1329 = vmatprep.subr.mxu0 0.0
    %1330 = vmatpush1.msra.mxu0 0.0
    %1331 = vmatprep.subr.mxu0 0.0
    %1332 = vmatpush1.msra.mxu0 0.0
    %1333 = vmatprep.subr.mxu0 0.0
    %1334 = vmatpush1.msra.mxu0 0.0
    %1335 = vmatprep.subr.mxu0 0.0
    %1336 = vmatpush1.msra.mxu0 0.0
    %1337 = vmatprep.subr.mxu0 0.0
    %1338 = vmatpush1.msra.mxu0 0.0
    %1339 = vmatprep.subr.mxu0 0.0
    %1340 = vmatpush1.msra.mxu0 0.0
    %1341 = vmatprep.subr.mxu0 0.0
    %1342 = vmatpush1.msra.mxu0 0.0
    %1343 = vmatprep.subr.mxu0 0.0
    %1344 = vmatpush1.msra.mxu0 0.0
    %1345 = vmatprep.subr.mxu0 0.0
    %1346 = vmatpush1.msra.mxu0 0.0
    %1347 = vmatprep.mubr.f32.mxu0 0.0
    %1348 = vmatmul.mubr.f32.gmra.mrb[0].mxu0 %v1264
    %v1349 = vpop.f32.mrb[0].mxu0
    %v1350 = vadd.f32 %v1282, %v1349
    %v1351 = vpop.f32.mrb[0].mxu0
    %1352 = vdwg.mxu0
    %1353 = vst [vmem:[#allocation8] sm:$0x1] %v1350
    // Predicated region
    $region34: #{tpu_custom_call.1} parent=1 // pred_check
      _
    $region35: #{tpu_custom_call.1} parent=1 // pred_check_branch
      %1355 = sbr.rel (0) target = $region37
    $region36: #{tpu_custom_call.1} parent=1 // pred_region
      %s1357 = ssub.s32 16, 16
      %1358 = vsyncadd [#allocation4], %s1357
      %s1360 = sshll.u32 [#allocation8], 4
      %s1361 = int_to_ptr.vmem [resolvable:$true] %s1360
      %1363 = dma.vmem_to_hbm [thread:$0]  %s1361, 16, %s5, [#allocation4]
    $region37: #{tpu_custom_call.1} parent=1 // pred_fallthru
      _
    // Predicated region
    $region38: #{tpu_custom_call.1} parent=1 // pred_check
      _
    $region39: #{tpu_custom_call.1} parent=1 // pred_check_branch
      %1365 = sbr.rel (0) target = $region41
    $region40: #{tpu_custom_call.1} parent=1 // pred_region
      %1366 = dma.done [#allocation4], 16
    $region41: #{tpu_custom_call.1} parent=1 // pred_fallthru
      _
    %1367 = vsyncpa [#allocation3], 1
    %1368 = vsyncpa [#allocation6], 1
    %1369 = vsyncpa [#allocation4], 1

</llo_original>
